<compile_context>
chip_gen: v7x
topology: tpu7x:2x2x1
jax: 0.10.0
libtpu: 0.0.40
codegen_flags: <defaults>
</compile_context>

<pallas_src>
import functools

import jax
import jax.numpy as jnp
from jax import lax
from jax.experimental import pallas as pl
from jax.experimental.pallas import tpu as pltpu


def _pick_tile(n, candidates):
    """Largest candidate tile that evenly divides n, else fall back to the full extent."""
    for t in candidates:
        if n % t == 0:
            return t
    # TODO(synk): pad/mask ragged N instead of falling back to a full-extent block
    # (a full-extent fallback at very large non-divisible N could exceed v7x VMEM).
    return n


# ---------------------- fused qkv projection (3 contiguous outputs) ----------------------

def qkv_linear_kernel(x_ref, w_ref, b_ref, q_ref, k_ref, v_ref, *, ahd, v_cols):
    # x: (tm, Cin), w: (2*ahd + v_cols, Cin) [nn.Linear layout], b: (1, 2*ahd + v_cols)
    acc = lax.dot_general(
        x_ref[...], w_ref[...],
        dimension_numbers=(((1,), (1,)), ((), ())),      # contract Cin vs Cin, no transpose
        preferred_element_type=jnp.float32)
    acc = acc + b_ref[...]
    # Three contiguous outputs (static column slices of the accumulator).
    q_ref[...] = acc[:, :ahd].astype(q_ref.dtype)
    k_ref[...] = acc[:, ahd:2 * ahd].astype(k_ref.dtype)
    v_ref[...] = acc[:, 2 * ahd:2 * ahd + v_cols].astype(v_ref.dtype)


def pallas_qkv_linear(x2d, w, b, *, ahd, v_cols, tm_candidates=(1024, 512, 256)):
    M, Cin = x2d.shape
    Cout = w.shape[0]
    tm = _pick_tile(M, tm_candidates)
    grid = (M // tm,)

    itemsize = jnp.dtype(x2d.dtype).itemsize
    cost = pl.CostEstimate(
        flops=2 * M * Cout * Cin,
        transcendentals=0,
        bytes_accessed=(M * Cin + Cout * Cin + Cout + M * Cout) * itemsize)

    out_shape = (jax.ShapeDtypeStruct((M, ahd), x2d.dtype),
                 jax.ShapeDtypeStruct((M, ahd), x2d.dtype),
                 jax.ShapeDtypeStruct((M, v_cols), x2d.dtype))

    return pl.pallas_call(
        functools.partial(qkv_linear_kernel, ahd=ahd, v_cols=v_cols),
        grid=grid,
        in_specs=[
            pl.BlockSpec((tm, Cin), lambda i: (i, 0)),        # stream M tiles
            pl.BlockSpec((Cout, Cin), lambda i: (0, 0)),      # weight VMEM-resident
            pl.BlockSpec((1, Cout), lambda i: (0, 0)),        # bias VMEM-resident
        ],
        out_specs=[
            pl.BlockSpec((tm, ahd), lambda i: (i, 0)),
            pl.BlockSpec((tm, ahd), lambda i: (i, 0)),
            pl.BlockSpec((tm, v_cols), lambda i: (i, 0)),
        ],
        out_shape=out_shape,
        compiler_params=pltpu.CompilerParams(dimension_semantics=("parallel",)),
        cost_estimate=cost,
    )(x2d, w, b.reshape(1, Cout))


# ------------------- flash attention + fused output projection -------------------

def flash_attn_proj_kernel(q_ref, k_ref, v_ref, pw_ref, pb_ref, o_ref,
                           m_sc, acc_sc, *, num_heads, head_dim):
    # q_ref: (tq, H*D), k_ref: (tkv, H*D), v_ref: (tkv, H*(D+1))  (last col per head == 1)
    # pw_ref: (dim, H*D) VMEM-resident proj weight, pb_ref: (1, dim)
    # o_ref: (tq, dim)
    # scratch: m_sc (H, tq, 1) f32 running max; acc_sc (H, tq, D+1) f32 running (pv | l).
    H, D = num_heads, head_dim
    ki = pl.program_id(2)

    @pl.when(ki == 0)
    def _init():
        m_sc[...] = jnp.full(m_sc.shape, -jnp.inf, dtype=m_sc.dtype)
        acc_sc[...] = jnp.zeros(acc_sc.shape, dtype=acc_sc.dtype)

    # Heads are few (4 here); static unroll keeps the lane slices static.
    # TODO(synk): for H >= 8 (real VideoMAE H=12) switch to lax.fori_loop over heads to
    # bound the per-head (tq, tkv) temporaries' live ranges.
    for h in range(H):
        q = q_ref[:, h * D:(h + 1) * D]                         # (tq, D); scale folded in W_q
        k = k_ref[:, h * D:(h + 1) * D]                         # (tkv, D)
        v = v_ref[:, h * (D + 1):(h + 1) * (D + 1)]             # (tkv, D+1), last col = 1

        s = lax.dot_general(q, k, (((1,), (1,)), ((), ())),
                            preferred_element_type=jnp.float32)  # (tq, tkv)

        m_prev = m_sc[h]                                         # (tq, 1)
        m_new = jnp.maximum(m_prev, jnp.max(s, axis=-1, keepdims=True))
        alpha = jnp.exp(m_prev - m_new)                          # (tq, 1)
        p = jnp.exp(s - m_new)                                   # (tq, tkv) f32
        # TODO(synk): if an attention mask is added later, guard alpha/p against
        # all -inf score rows (currently impossible -> no NaN path).

        # PV matmul on the augmented V also produces the softmax row-sum (last column)
        # on the MXU — no cross-lane reduction needed.  attn_drop(p=0) is the identity.
        pv = lax.dot_general(p.astype(v.dtype), v, (((1,), (0,)), ((), ())),
                             preferred_element_type=jnp.float32)  # (tq, D+1)
        acc_sc[h] = alpha * acc_sc[h] + pv
        m_sc[h] = m_new

    @pl.when(ki == pl.num_programs(2) - 1)
    def _finalize():
        outs = []
        for h in range(H):
            acc_h = acc_sc[h]                                            # (tq, D+1)
            inv_l = pl.reciprocal(acc_h[:, D:D + 1], approx=True)        # EUP, ~free
            outs.append(acc_h[:, :D] * inv_l)                            # (tq, D) f32
        o_heads = jnp.concatenate(outs, axis=-1)                         # (tq, H*D) lane-dense
        # Fused output projection (proj_drop(0) = identity), then ONE full-width store.
        out = lax.dot_general(o_heads.astype(pw_ref.dtype), pw_ref[...],
                              (((1,), (1,)), ((), ())),
                              preferred_element_type=jnp.float32)        # (tq, dim)
        o_ref[...] = (out + pb_ref[...]).astype(o_ref.dtype)


def pallas_flash_attn_proj(q, k, v, proj_w, proj_b, *, num_heads, head_dim,
                           tq_candidates=(512, 256, 128),
                           tkv_candidates=(512, 256, 128)):
    B, N, ahd = q.shape
    v_cols = v.shape[-1]                       # H * (D + 1)
    dim = proj_w.shape[0]
    tq = _pick_tile(N, tq_candidates)
    tkv = _pick_tile(N, tkv_candidates)
    grid = (B, N // tq, N // tkv)              # reduction (kv) axis last

    itemsize = jnp.dtype(q.dtype).itemsize
    n_kv_refetch = max(N // tq, 1)
    cost = pl.CostEstimate(
        flops=2 * B * num_heads * N * N * (2 * head_dim + 1) + 2 * B * N * ahd * dim,
        transcendentals=B * num_heads * N * N,
        bytes_accessed=(B * N * ahd
                        + n_kv_refetch * B * N * (ahd + v_cols)
                        + B * N * dim) * itemsize)

    return pl.pallas_call(
        functools.partial(flash_attn_proj_kernel, num_heads=num_heads, head_dim=head_dim),
        grid=grid,
        in_specs=[
            pl.BlockSpec((None, tq, ahd), lambda b, qi, ki: (b, qi, 0)),
            pl.BlockSpec((None, tkv, ahd), lambda b, qi, ki: (b, ki, 0)),
            pl.BlockSpec((None, tkv, v_cols), lambda b, qi, ki: (b, ki, 0)),
            pl.BlockSpec((dim, ahd), lambda b, qi, ki: (0, 0)),   # proj weight resident
            pl.BlockSpec((1, dim), lambda b, qi, ki: (0, 0)),     # proj bias resident
        ],
        out_specs=pl.BlockSpec((None, tq, dim), lambda b, qi, ki: (b, qi, 0)),
        out_shape=jax.ShapeDtypeStruct((B, N, dim), q.dtype),
        scratch_shapes=[
            pltpu.VMEM((num_heads, tq, 1), jnp.float32),            # running max  m
            pltpu.VMEM((num_heads, tq, head_dim + 1), jnp.float32),  # running (pv | l)
        ],
        compiler_params=pltpu.CompilerParams(
            dimension_semantics=("parallel", "parallel", "arbitrary"),
            vmem_limit_bytes=32 * 1024 * 1024),   # fits v7x (64 MiB physical) and v5e/v6e
        cost_estimate=cost,
    )(q, k, v, proj_w, proj_b.reshape(1, dim))


# ------------------------------- module forward -------------------------------

def attention_forward(x, params, *, num_heads, scale):
    """Pallas version of Attention.forward (qkv_bias=True, attn_drop=proj_drop=0)."""
    B, N, C = x.shape
    ahd = params["q_bias"].shape[0]
    D = ahd // num_heads
    dt = x.dtype

    qkv_w = params["qkv_w"]                                    # (3*ahd, C)
    q_w = qkv_w[:ahd] * scale                                  # fold softmax scale into W_q
    k_w = qkv_w[ahd:2 * ahd]
    v_w = qkv_w[2 * ahd:]

    # Augment V with one all-zero weight row (bias = 1) per head: the projection then
    # emits a per-head ones column, so the flash kernel's PV matmul also yields the
    # softmax row-sum on the MXU.
    v_w_aug = jnp.concatenate(
        [v_w.reshape(num_heads, D, C), jnp.zeros((num_heads, 1, C), v_w.dtype)],
        axis=1).reshape(num_heads * (D + 1), C)
    v_b_aug = jnp.concatenate(
        [params["v_bias"].reshape(num_heads, D), jnp.ones((num_heads, 1), dt)],
        axis=1).reshape(num_heads * (D + 1))

    w = jnp.concatenate([q_w, k_w, v_w_aug], axis=0)
    # qkv bias = cat(q_bias*scale, zeros (k has no bias in the module), v_bias | 1s).
    b = jnp.concatenate([params["q_bias"] * scale, jnp.zeros((ahd,), dt), v_b_aug])

    v_cols = num_heads * (D + 1)
    q2d, k2d, v2d = pallas_qkv_linear(x.reshape(B * N, C), w, b, ahd=ahd, v_cols=v_cols)
    q3 = q2d.reshape(B, N, ahd)                                # free row-major reshapes
    k3 = k2d.reshape(B, N, ahd)
    v3 = v2d.reshape(B, N, v_cols)

    # Flash attention with the output projection fused into its finalize step.
    return pallas_flash_attn_proj(q3, k3, v3, params["proj_w"], params["proj_b"],
                                  num_heads=num_heads, head_dim=D)


# Pure-JAX reference (mirrors the PyTorch forward exactly) for verification.
def attention_reference(x, params, *, num_heads, scale):
    B, N, C = x.shape
    all_head_dim = params["q_bias"].shape[0]
    head_dim = all_head_dim // num_heads
    qkv_bias = jnp.concatenate(
        [params["q_bias"], jnp.zeros_like(params["v_bias"]), params["v_bias"]])
    qkv = x @ params["qkv_w"].T + qkv_bias
    qkv = qkv.reshape(B, N, 3, num_heads, head_dim).transpose(2, 0, 3, 1, 4)
    q, k, v = qkv[0] * scale, qkv[1], qkv[2]
    attn = q @ jnp.swapaxes(k, -2, -1)
    attn = jax.nn.softmax(attn, axis=-1)
    o = jnp.swapaxes(attn @ v, 1, 2).reshape(B, N, all_head_dim)
    return o @ params["proj_w"].T + params["proj_b"]


# ------------------------------------ main -------------------------------------

def _run_case(key, *, B, N, C, num_heads, atol, rtol):
    head_dim = C // num_heads
    all_head_dim = head_dim * num_heads
    scale = head_dim ** -0.5

    k_x, k_qkv, k_pw, k_pb, k_qb, k_vb = jax.random.split(key, 6)
    x = jax.random.normal(k_x, (B, N, C), dtype=jnp.float32)
    params = {
        "qkv_w": 0.05 * jax.random.normal(k_qkv, (all_head_dim * 3, C), jnp.float32),
        "q_bias": 0.05 * jax.random.normal(k_qb, (all_head_dim,), jnp.float32),
        "v_bias": 0.05 * jax.random.normal(k_vb, (all_head_dim,), jnp.float32),
        "proj_w": 0.05 * jax.random.normal(k_pw, (C, all_head_dim), jnp.float32),
        "proj_b": 0.05 * jax.random.normal(k_pb, (C,), jnp.float32),
    }

    fwd = jax.jit(functools.partial(attention_forward, num_heads=num_heads, scale=scale))
    out = jax.block_until_ready(fwd(x, params))

    ref = attention_reference(x, params, num_heads=num_heads, scale=scale)
    assert out.shape == (B, N, C)
    max_err = jnp.max(jnp.abs(out - ref))
    assert jnp.allclose(out, ref, atol=atol, rtol=rtol), f"mismatch vs reference: {max_err}"


if __name__ == "__main__":
    key = jax.random.PRNGKey(0)
    k_small, k_large = jax.random.split(key)

    # Small shape from the module spec: dim=32, num_heads=4, head_dim=8.
    # (tolerances account for the approximate EUP reciprocal in the softmax normalization)
    _run_case(k_small, B=2, N=8, C=32, num_heads=4, atol=2e-3, rtol=1e-2)

    # Larger sequence: exercises M-tiling in the qkv projection (tm=1024, grid=2) and the
    # multi-step online-softmax kv loop (tq=tkv=512 -> 2 kv steps) of the flash kernel.
    _run_case(k_large, B=2, N=1024, C=32, num_heads=4, atol=2e-3, rtol=1e-2)

    print("KERNEL_OK")
</pallas_src>

<mosaic_0001>
module attributes {stable_mosaic.version = 11 : i64} {
  func.func @qkv_linear_kernel(%arg0: i32, %arg1: memref<16x32xf32, #tpu.memory_space<vmem>>, %arg2: memref<100x32xf32, #tpu.memory_space<vmem>>, %arg3: memref<1x100xf32, #tpu.memory_space<vmem>>, %arg4: memref<16x32xf32, #tpu.memory_space<vmem>>, %arg5: memref<16x32xf32, #tpu.memory_space<vmem>>, %arg6: memref<16x36xf32, #tpu.memory_space<vmem>>) attributes {dimension_semantics = [#tpu.dimension_semantics<parallel>], iteration_bounds = array<i64: 1>, scalar_prefetch = 0 : i64, scratch_operands = 0 : i64, tpu.core_type = #tpu.core_type<tc>, window_params = [{transform_indices = @transform_0, window_bounds = array<i64: 16, 32>}, {pipeline_mode = #tpu.pipeline_mode<synchronous>, transform_indices = @transform_1, window_bounds = array<i64: 100, 32>}, {pipeline_mode = #tpu.pipeline_mode<synchronous>, transform_indices = @transform_2, window_bounds = array<i64: 1, 100>}, {transform_indices = @transform_3, window_bounds = array<i64: 16, 32>}, {transform_indices = @transform_4, window_bounds = array<i64: 16, 32>}, {transform_indices = @transform_5, window_bounds = array<i64: 16, 36>}]} {
    %c0 = arith.constant 0 : index
    %c0_0 = arith.constant 0 : index
    %0 = vector.load %arg1[%c0, %c0_0] : memref<16x32xf32, #tpu.memory_space<vmem>>, vector<16x32xf32>
    %c0_1 = arith.constant 0 : index
    %c0_2 = arith.constant 0 : index
    %1 = vector.load %arg2[%c0_1, %c0_2] : memref<100x32xf32, #tpu.memory_space<vmem>>, vector<100x32xf32>
    %cst = arith.constant dense<0.000000e+00> : vector<16x100xf32>
    %2 = tpu.matmul %0, %1, %cst {dimension_numbers = #tpu.dot_dimension_numbers<[1], [1], [0], [0], [0, 0, 1, 0], [], []>} : vector<16x32xf32>, vector<100x32xf32>, vector<16x100xf32> -> vector<16x100xf32>
    %c0_3 = arith.constant 0 : index
    %c0_4 = arith.constant 0 : index
    %3 = vector.load %arg3[%c0_3, %c0_4] : memref<1x100xf32, #tpu.memory_space<vmem>>, vector<1x100xf32>
    %4 = vector.broadcast %3 : vector<1x100xf32> to vector<16x100xf32>
    %5 = arith.addf %2, %4 : vector<16x100xf32>
    %6 = vector.extract_strided_slice %5 {offsets = [0, 0], sizes = [16, 32], strides = [1, 1]} : vector<16x100xf32> to vector<16x32xf32>
    %c0_5 = arith.constant 0 : index
    %c0_6 = arith.constant 0 : index
    %7 = vector.load %arg4[%c0_5, %c0_6] : memref<16x32xf32, #tpu.memory_space<vmem>>, vector<16x32xf32>
    tpu.vector_store %arg4[%c0_5, %c0_6], %6 {strides = array<i32>} : memref<16x32xf32, #tpu.memory_space<vmem>>, vector<16x32xf32>,
    %8 = vector.extract_strided_slice %5 {offsets = [0, 32], sizes = [16, 32], strides = [1, 1]} : vector<16x100xf32> to vector<16x32xf32>
    %c0_7 = arith.constant 0 : index
    %c0_8 = arith.constant 0 : index
    %9 = vector.load %arg5[%c0_7, %c0_8] : memref<16x32xf32, #tpu.memory_space<vmem>>, vector<16x32xf32>
    tpu.vector_store %arg5[%c0_7, %c0_8], %8 {strides = array<i32>} : memref<16x32xf32, #tpu.memory_space<vmem>>, vector<16x32xf32>,
    %10 = vector.extract_strided_slice %5 {offsets = [0, 64], sizes = [16, 36], strides = [1, 1]} : vector<16x100xf32> to vector<16x36xf32>
    %c0_9 = arith.constant 0 : index
    %c0_10 = arith.constant 0 : index
    %11 = vector.load %arg6[%c0_9, %c0_10] : memref<16x36xf32, #tpu.memory_space<vmem>>, vector<16x36xf32>
    tpu.vector_store %arg6[%c0_9, %c0_10], %10 {strides = array<i32>} : memref<16x36xf32, #tpu.memory_space<vmem>>, vector<16x36xf32>,
    return
  }
  func.func @transform_0(%arg0: i32) -> (i32, i32) {
    %c0_i32 = arith.constant 0 : i32
    %c0_i32_0 = arith.constant 0 : i32
    return %arg0, %c0_i32 : i32, i32
  }
  func.func @transform_1(%arg0: i32) -> (i32, i32) {
    %c0_i32 = arith.constant 0 : i32
    %c0_i32_0 = arith.constant 0 : i32
    %c0_i32_1 = arith.constant 0 : i32
    return %c0_i32, %c0_i32_0 : i32, i32
  }
  func.func @transform_2(%arg0: i32) -> (i32, i32) {
    %c0_i32 = arith.constant 0 : i32
    %c0_i32_0 = arith.constant 0 : i32
    %c0_i32_1 = arith.constant 0 : i32
    return %c0_i32, %c0_i32_0 : i32, i32
  }
  func.func @transform_3(%arg0: i32) -> (i32, i32) {
    %c0_i32 = arith.constant 0 : i32
    %c0_i32_0 = arith.constant 0 : i32
    return %arg0, %c0_i32 : i32, i32
  }
  func.func @transform_4(%arg0: i32) -> (i32, i32) {
    %c0_i32 = arith.constant 0 : i32
    %c0_i32_0 = arith.constant 0 : i32
    return %arg0, %c0_i32 : i32, i32
  }
  func.func @transform_5(%arg0: i32) -> (i32, i32) {
    %c0_i32 = arith.constant 0 : i32
    %c0_i32_0 = arith.constant 0 : i32
    return %arg0, %c0_i32 : i32, i32
  }
}

module attributes {stable_mosaic.version = 11 : i64} {
  func.func @flash_attn_proj_kernel(%arg0: i32, %arg1: i32, %arg2: i32, %arg3: memref<1x8x32xf32, #tpu.memory_space<vmem>>, %arg4: memref<1x8x32xf32, #tpu.memory_space<vmem>>, %arg5: memref<1x8x36xf32, #tpu.memory_space<vmem>>, %arg6: memref<32x32xf32, #tpu.memory_space<vmem>>, %arg7: memref<1x32xf32, #tpu.memory_space<vmem>>, %arg8: memref<1x8x32xf32, #tpu.memory_space<vmem>>, %arg9: memref<4x8x1xf32, #tpu.memory_space<vmem>>, %arg10: memref<4x8x9xf32, #tpu.memory_space<vmem>>) attributes {dimension_semantics = [#tpu.dimension_semantics<parallel>, #tpu.dimension_semantics<parallel>, #tpu.dimension_semantics<arbitrary>], iteration_bounds = array<i64: 2, 1, 1>, scalar_prefetch = 0 : i64, scratch_operands = 2 : i64, tpu.core_type = #tpu.core_type<tc>, window_params = [{transform_indices = @transform_0, window_bounds = array<i64: 1, 8, 32>}, {transform_indices = @transform_1, window_bounds = array<i64: 1, 8, 32>}, {transform_indices = @transform_2, window_bounds = array<i64: 1, 8, 36>}, {pipeline_mode = #tpu.pipeline_mode<synchronous>, transform_indices = @transform_3, window_bounds = array<i64: 32, 32>}, {pipeline_mode = #tpu.pipeline_mode<synchronous>, transform_indices = @transform_4, window_bounds = array<i64: 1, 32>}, {transform_indices = @transform_5, window_bounds = array<i64: 1, 8, 32>}]} {
    %c0_i32 = arith.constant 0 : i32
    %0 = arith.cmpi eq, %arg2, %c0_i32 : i32
    %1 = arith.extui %0 : i1 to i32
    %c0_i32_0 = arith.constant 0 : i32
    %2 = arith.cmpi ne, %1, %c0_i32_0 : i32
    scf.if %2 {
      %cst_88 = arith.constant 0xFF800000 : f32
      %122 = vector.broadcast %cst_88 : f32 to vector<4x8x1xf32>
      %c0_89 = arith.constant 0 : index
      %c0_90 = arith.constant 0 : index
      %c0_91 = arith.constant 0 : index
      %123 = vector.load %arg9[%c0_89, %c0_90, %c0_91] : memref<4x8x1xf32, #tpu.memory_space<vmem>>, vector<4x8x1xf32>
      tpu.vector_store %arg9[%c0_89, %c0_90, %c0_91], %122 {strides = array<i32>} : memref<4x8x1xf32, #tpu.memory_space<vmem>>, vector<4x8x1xf32>,
      %cst_92 = arith.constant 0.000000e+00 : f32
      %124 = vector.broadcast %cst_92 : f32 to vector<4x8x9xf32>
      %c0_93 = arith.constant 0 : index
      %c0_94 = arith.constant 0 : index
      %c0_95 = arith.constant 0 : index
      %125 = vector.load %arg10[%c0_93, %c0_94, %c0_95] : memref<4x8x9xf32, #tpu.memory_space<vmem>>, vector<4x8x9xf32>
      tpu.vector_store %arg10[%c0_93, %c0_94, %c0_95], %124 {strides = array<i32>} : memref<4x8x9xf32, #tpu.memory_space<vmem>>, vector<4x8x9xf32>,
    } else {
    }
    %c0 = arith.constant 0 : index
    %c0_1 = arith.constant 0 : index
    %c0_2 = arith.constant 0 : index
    %3 = vector.load %arg3[%c0, %c0_1, %c0_2] : memref<1x8x32xf32, #tpu.memory_space<vmem>>, vector<1x8x8xf32>
    %4 = vector.shape_cast %3 : vector<1x8x8xf32> to vector<8x8xf32>
    %c0_3 = arith.constant 0 : index
    %c0_4 = arith.constant 0 : index
    %c0_5 = arith.constant 0 : index
    %5 = vector.load %arg4[%c0_3, %c0_4, %c0_5] : memref<1x8x32xf32, #tpu.memory_space<vmem>>, vector<1x8x8xf32>
    %6 = vector.shape_cast %5 : vector<1x8x8xf32> to vector<8x8xf32>
    %c0_6 = arith.constant 0 : index
    %c0_7 = arith.constant 0 : index
    %c0_8 = arith.constant 0 : index
    %7 = vector.load %arg5[%c0_6, %c0_7, %c0_8] : memref<1x8x36xf32, #tpu.memory_space<vmem>>, vector<1x8x9xf32>
    %8 = vector.shape_cast %7 : vector<1x8x9xf32> to vector<8x9xf32>
    %cst = arith.constant dense<0.000000e+00> : vector<8x8xf32>
    %9 = tpu.matmul %4, %6, %cst {dimension_numbers = #tpu.dot_dimension_numbers<[1], [1], [0], [0], [0, 0, 1, 0], [], []>} : vector<8x8xf32>, vector<8x8xf32>, vector<8x8xf32> -> vector<8x8xf32>
    %c0_9 = arith.constant 0 : index
    %c0_10 = arith.constant 0 : index
    %c0_11 = arith.constant 0 : index
    %10 = vector.load %arg9[%c0_9, %c0_10, %c0_11] : memref<4x8x1xf32, #tpu.memory_space<vmem>>, vector<1x8x1xf32>
    %11 = vector.shape_cast %10 : vector<1x8x1xf32> to vector<8x1xf32>
    %cst_12 = arith.constant dense<0xFF800000> : vector<8xf32>
    %12 = vector.multi_reduction <maximumf>, %9, %cst_12 [1] : vector<8x8xf32> to vector<8xf32>
    %13 = vector.shape_cast %12 : vector<8xf32> to vector<8x1xf32>
    %14 = arith.maximumf %11, %13 : vector<8x1xf32>
    %15 = arith.subf %11, %14 : vector<8x1xf32>
    %16 = math.exp %15 : vector<8x1xf32>
    %17 = vector.broadcast %14 : vector<8x1xf32> to vector<8x8xf32>
    %18 = arith.subf %9, %17 : vector<8x8xf32>
    %19 = math.exp %18 : vector<8x8xf32>
    %cst_13 = arith.constant dense<0.000000e+00> : vector<8x9xf32>
    %20 = tpu.matmul %19, %8, %cst_13 {dimension_numbers = #tpu.dot_dimension_numbers<[1], [0], [0], [1], [0, 0, 1, 1], [], []>} : vector<8x8xf32>, vector<8x9xf32>, vector<8x9xf32> -> vector<8x9xf32>
    %c0_14 = arith.constant 0 : index
    %c0_15 = arith.constant 0 : index
    %c0_16 = arith.constant 0 : index
    %21 = vector.load %arg10[%c0_14, %c0_15, %c0_16] : memref<4x8x9xf32, #tpu.memory_space<vmem>>, vector<1x8x9xf32>
    %22 = vector.shape_cast %21 : vector<1x8x9xf32> to vector<8x9xf32>
    %23 = vector.broadcast %16 : vector<8x1xf32> to vector<8x9xf32>
    %24 = arith.mulf %23, %22 : vector<8x9xf32>
    %25 = arith.addf %24, %20 : vector<8x9xf32>
    %c0_17 = arith.constant 0 : index
    %c0_18 = arith.constant 0 : index
    %c0_19 = arith.constant 0 : index
    %26 = vector.load %arg10[%c0_17, %c0_18, %c0_19] : memref<4x8x9xf32, #tpu.memory_space<vmem>>, vector<1x8x9xf32>
    %27 = vector.shape_cast %26 : vector<1x8x9xf32> to vector<8x9xf32>
    %28 = vector.shape_cast %25 : vector<8x9xf32> to vector<1x8x9xf32>
    tpu.vector_store %arg10[%c0_17, %c0_18, %c0_19], %28 {strides = array<i32>} : memref<4x8x9xf32, #tpu.memory_space<vmem>>, vector<1x8x9xf32>,
    %c0_20 = arith.constant 0 : index
    %c0_21 = arith.constant 0 : index
    %c0_22 = arith.constant 0 : index
    %29 = vector.load %arg9[%c0_20, %c0_21, %c0_22] : memref<4x8x1xf32, #tpu.memory_space<vmem>>, vector<1x8x1xf32>
    %30 = vector.shape_cast %29 : vector<1x8x1xf32> to vector<8x1xf32>
    %31 = vector.shape_cast %14 : vector<8x1xf32> to vector<1x8x1xf32>
    tpu.vector_store %arg9[%c0_20, %c0_21, %c0_22], %31 {strides = array<i32>} : memref<4x8x1xf32, #tpu.memory_space<vmem>>, vector<1x8x1xf32>,
    %c0_23 = arith.constant 0 : index
    %c0_24 = arith.constant 0 : index
    %c8 = arith.constant 8 : index
    %32 = vector.load %arg3[%c0_23, %c0_24, %c8] : memref<1x8x32xf32, #tpu.memory_space<vmem>>, vector<1x8x8xf32>
    %33 = vector.shape_cast %32 : vector<1x8x8xf32> to vector<8x8xf32>
    %c0_25 = arith.constant 0 : index
    %c0_26 = arith.constant 0 : index
    %c8_27 = arith.constant 8 : index
    %34 = vector.load %arg4[%c0_25, %c0_26, %c8_27] : memref<1x8x32xf32, #tpu.memory_space<vmem>>, vector<1x8x8xf32>
    %35 = vector.shape_cast %34 : vector<1x8x8xf32> to vector<8x8xf32>
    %c0_28 = arith.constant 0 : index
    %c0_29 = arith.constant 0 : index
    %c9 = arith.constant 9 : index
    %36 = vector.load %arg5[%c0_28, %c0_29, %c9] : memref<1x8x36xf32, #tpu.memory_space<vmem>>, vector<1x8x9xf32>
    %37 = vector.shape_cast %36 : vector<1x8x9xf32> to vector<8x9xf32>
    %cst_30 = arith.constant dense<0.000000e+00> : vector<8x8xf32>
    %38 = tpu.matmul %33, %35, %cst_30 {dimension_numbers = #tpu.dot_dimension_numbers<[1], [1], [0], [0], [0, 0, 1, 0], [], []>} : vector<8x8xf32>, vector<8x8xf32>, vector<8x8xf32> -> vector<8x8xf32>
    %c1 = arith.constant 1 : index
    %c0_31 = arith.constant 0 : index
    %c0_32 = arith.constant 0 : index
    %39 = vector.load %arg9[%c1, %c0_31, %c0_32] : memref<4x8x1xf32, #tpu.memory_space<vmem>>, vector<1x8x1xf32>
    %40 = vector.shape_cast %39 : vector<1x8x1xf32> to vector<8x1xf32>
    %cst_33 = arith.constant dense<0xFF800000> : vector<8xf32>
    %41 = vector.multi_reduction <maximumf>, %38, %cst_33 [1] : vector<8x8xf32> to vector<8xf32>
    %42 = vector.shape_cast %41 : vector<8xf32> to vector<8x1xf32>
    %43 = arith.maximumf %40, %42 : vector<8x1xf32>
    %44 = arith.subf %40, %43 : vector<8x1xf32>
    %45 = math.exp %44 : vector<8x1xf32>
    %46 = vector.broadcast %43 : vector<8x1xf32> to vector<8x8xf32>
    %47 = arith.subf %38, %46 : vector<8x8xf32>
    %48 = math.exp %47 : vector<8x8xf32>
    %cst_34 = arith.constant dense<0.000000e+00> : vector<8x9xf32>
    %49 = tpu.matmul %48, %37, %cst_34 {dimension_numbers = #tpu.dot_dimension_numbers<[1], [0], [0], [1], [0, 0, 1, 1], [], []>} : vector<8x8xf32>, vector<8x9xf32>, vector<8x9xf32> -> vector<8x9xf32>
    %c1_35 = arith.constant 1 : index
    %c0_36 = arith.constant 0 : index
    %c0_37 = arith.constant 0 : index
    %50 = vector.load %arg10[%c1_35, %c0_36, %c0_37] : memref<4x8x9xf32, #tpu.memory_space<vmem>>, vector<1x8x9xf32>
    %51 = vector.shape_cast %50 : vector<1x8x9xf32> to vector<8x9xf32>
    %52 = vector.broadcast %45 : vector<8x1xf32> to vector<8x9xf32>
    %53 = arith.mulf %52, %51 : vector<8x9xf32>
    %54 = arith.addf %53, %49 : vector<8x9xf32>
    %c1_38 = arith.constant 1 : index
    %c0_39 = arith.constant 0 : index
    %c0_40 = arith.constant 0 : index
    %55 = vector.load %arg10[%c1_38, %c0_39, %c0_40] : memref<4x8x9xf32, #tpu.memory_space<vmem>>, vector<1x8x9xf32>
    %56 = vector.shape_cast %55 : vector<1x8x9xf32> to vector<8x9xf32>
    %57 = vector.shape_cast %54 : vector<8x9xf32> to vector<1x8x9xf32>
    tpu.vector_store %arg10[%c1_38, %c0_39, %c0_40], %57 {strides = array<i32>} : memref<4x8x9xf32, #tpu.memory_space<vmem>>, vector<1x8x9xf32>,
    %c1_41 = arith.constant 1 : index
    %c0_42 = arith.constant 0 : index
    %c0_43 = arith.constant 0 : index
    %58 = vector.load %arg9[%c1_41, %c0_42, %c0_43] : memref<4x8x1xf32, #tpu.memory_space<vmem>>, vector<1x8x1xf32>
    %59 = vector.shape_cast %58 : vector<1x8x1xf32> to vector<8x1xf32>
    %60 = vector.shape_cast %43 : vector<8x1xf32> to vector<1x8x1xf32>
    tpu.vector_store %arg9[%c1_41, %c0_42, %c0_43], %60 {strides = array<i32>} : memref<4x8x1xf32, #tpu.memory_space<vmem>>, vector<1x8x1xf32>,
    %c0_44 = arith.constant 0 : index
    %c0_45 = arith.constant 0 : index
    %c16 = arith.constant 16 : index
    %61 = vector.load %arg3[%c0_44, %c0_45, %c16] : memref<1x8x32xf32, #tpu.memory_space<vmem>>, vector<1x8x8xf32>
    %62 = vector.shape_cast %61 : vector<1x8x8xf32> to vector<8x8xf32>
    %c0_46 = arith.constant 0 : index
    %c0_47 = arith.constant 0 : index
    %c16_48 = arith.constant 16 : index
    %63 = vector.load %arg4[%c0_46, %c0_47, %c16_48] : memref<1x8x32xf32, #tpu.memory_space<vmem>>, vector<1x8x8xf32>
    %64 = vector.shape_cast %63 : vector<1x8x8xf32> to vector<8x8xf32>
    %c0_49 = arith.constant 0 : index
    %c0_50 = arith.constant 0 : index
    %c18 = arith.constant 18 : index
    %65 = vector.load %arg5[%c0_49, %c0_50, %c18] : memref<1x8x36xf32, #tpu.memory_space<vmem>>, vector<1x8x9xf32>
    %66 = vector.shape_cast %65 : vector<1x8x9xf32> to vector<8x9xf32>
    %cst_51 = arith.constant dense<0.000000e+00> : vector<8x8xf32>
    %67 = tpu.matmul %62, %64, %cst_51 {dimension_numbers = #tpu.dot_dimension_numbers<[1], [1], [0], [0], [0, 0, 1, 0], [], []>} : vector<8x8xf32>, vector<8x8xf32>, vector<8x8xf32> -> vector<8x8xf32>
    %c2 = arith.constant 2 : index
    %c0_52 = arith.constant 0 : index
    %c0_53 = arith.constant 0 : index
    %68 = vector.load %arg9[%c2, %c0_52, %c0_53] : memref<4x8x1xf32, #tpu.memory_space<vmem>>, vector<1x8x1xf32>
    %69 = vector.shape_cast %68 : vector<1x8x1xf32> to vector<8x1xf32>
    %cst_54 = arith.constant dense<0xFF800000> : vector<8xf32>
    %70 = vector.multi_reduction <maximumf>, %67, %cst_54 [1] : vector<8x8xf32> to vector<8xf32>
    %71 = vector.shape_cast %70 : vector<8xf32> to vector<8x1xf32>
    %72 = arith.maximumf %69, %71 : vector<8x1xf32>
    %73 = arith.subf %69, %72 : vector<8x1xf32>
    %74 = math.exp %73 : vector<8x1xf32>
    %75 = vector.broadcast %72 : vector<8x1xf32> to vector<8x8xf32>
    %76 = arith.subf %67, %75 : vector<8x8xf32>
    %77 = math.exp %76 : vector<8x8xf32>
    %cst_55 = arith.constant dense<0.000000e+00> : vector<8x9xf32>
    %78 = tpu.matmul %77, %66, %cst_55 {dimension_numbers = #tpu.dot_dimension_numbers<[1], [0], [0], [1], [0, 0, 1, 1], [], []>} : vector<8x8xf32>, vector<8x9xf32>, vector<8x9xf32> -> vector<8x9xf32>
    %c2_56 = arith.constant 2 : index
    %c0_57 = arith.constant 0 : index
    %c0_58 = arith.constant 0 : index
    %79 = vector.load %arg10[%c2_56, %c0_57, %c0_58] : memref<4x8x9xf32, #tpu.memory_space<vmem>>, vector<1x8x9xf32>
    %80 = vector.shape_cast %79 : vector<1x8x9xf32> to vector<8x9xf32>
    %81 = vector.broadcast %74 : vector<8x1xf32> to vector<8x9xf32>
    %82 = arith.mulf %81, %80 : vector<8x9xf32>
    %83 = arith.addf %82, %78 : vector<8x9xf32>
    %c2_59 = arith.constant 2 : index
    %c0_60 = arith.constant 0 : index
    %c0_61 = arith.constant 0 : index
    %84 = vector.load %arg10[%c2_59, %c0_60, %c0_61] : memref<4x8x9xf32, #tpu.memory_space<vmem>>, vector<1x8x9xf32>
    %85 = vector.shape_cast %84 : vector<1x8x9xf32> to vector<8x9xf32>
    %86 = vector.shape_cast %83 : vector<8x9xf32> to vector<1x8x9xf32>
    tpu.vector_store %arg10[%c2_59, %c0_60, %c0_61], %86 {strides = array<i32>} : memref<4x8x9xf32, #tpu.memory_space<vmem>>, vector<1x8x9xf32>,
    %c2_62 = arith.constant 2 : index
    %c0_63 = arith.constant 0 : index
    %c0_64 = arith.constant 0 : index
    %87 = vector.load %arg9[%c2_62, %c0_63, %c0_64] : memref<4x8x1xf32, #tpu.memory_space<vmem>>, vector<1x8x1xf32>
    %88 = vector.shape_cast %87 : vector<1x8x1xf32> to vector<8x1xf32>
    %89 = vector.shape_cast %72 : vector<8x1xf32> to vector<1x8x1xf32>
    tpu.vector_store %arg9[%c2_62, %c0_63, %c0_64], %89 {strides = array<i32>} : memref<4x8x1xf32, #tpu.memory_space<vmem>>, vector<1x8x1xf32>,
    %c0_65 = arith.constant 0 : index
    %c0_66 = arith.constant 0 : index
    %c24 = arith.constant 24 : index
    %90 = vector.load %arg3[%c0_65, %c0_66, %c24] : memref<1x8x32xf32, #tpu.memory_space<vmem>>, vector<1x8x8xf32>
    %91 = vector.shape_cast %90 : vector<1x8x8xf32> to vector<8x8xf32>
    %c0_67 = arith.constant 0 : index
    %c0_68 = arith.constant 0 : index
    %c24_69 = arith.constant 24 : index
    %92 = vector.load %arg4[%c0_67, %c0_68, %c24_69] : memref<1x8x32xf32, #tpu.memory_space<vmem>>, vector<1x8x8xf32>
    %93 = vector.shape_cast %92 : vector<1x8x8xf32> to vector<8x8xf32>
    %c0_70 = arith.constant 0 : index
    %c0_71 = arith.constant 0 : index
    %c27 = arith.constant 27 : index
    %94 = vector.load %arg5[%c0_70, %c0_71, %c27] : memref<1x8x36xf32, #tpu.memory_space<vmem>>, vector<1x8x9xf32>
    %95 = vector.shape_cast %94 : vector<1x8x9xf32> to vector<8x9xf32>
    %cst_72 = arith.constant dense<0.000000e+00> : vector<8x8xf32>
    %96 = tpu.matmul %91, %93, %cst_72 {dimension_numbers = #tpu.dot_dimension_numbers<[1], [1], [0], [0], [0, 0, 1, 0], [], []>} : vector<8x8xf32>, vector<8x8xf32>, vector<8x8xf32> -> vector<8x8xf32>
    %c3 = arith.constant 3 : index
    %c0_73 = arith.constant 0 : index
    %c0_74 = arith.constant 0 : index
    %97 = vector.load %arg9[%c3, %c0_73, %c0_74] : memref<4x8x1xf32, #tpu.memory_space<vmem>>, vector<1x8x1xf32>
    %98 = vector.shape_cast %97 : vector<1x8x1xf32> to vector<8x1xf32>
    %cst_75 = arith.constant dense<0xFF800000> : vector<8xf32>
    %99 = vector.multi_reduction <maximumf>, %96, %cst_75 [1] : vector<8x8xf32> to vector<8xf32>
    %100 = vector.shape_cast %99 : vector<8xf32> to vector<8x1xf32>
    %101 = arith.maximumf %98, %100 : vector<8x1xf32>
    %102 = arith.subf %98, %101 : vector<8x1xf32>
    %103 = math.exp %102 : vector<8x1xf32>
    %104 = vector.broadcast %101 : vector<8x1xf32> to vector<8x8xf32>
    %105 = arith.subf %96, %104 : vector<8x8xf32>
    %106 = math.exp %105 : vector<8x8xf32>
    %cst_76 = arith.constant dense<0.000000e+00> : vector<8x9xf32>
    %107 = tpu.matmul %106, %95, %cst_76 {dimension_numbers = #tpu.dot_dimension_numbers<[1], [0], [0], [1], [0, 0, 1, 1], [], []>} : vector<8x8xf32>, vector<8x9xf32>, vector<8x9xf32> -> vector<8x9xf32>
    %c3_77 = arith.constant 3 : index
    %c0_78 = arith.constant 0 : index
    %c0_79 = arith.constant 0 : index
    %108 = vector.load %arg10[%c3_77, %c0_78, %c0_79] : memref<4x8x9xf32, #tpu.memory_space<vmem>>, vector<1x8x9xf32>
    %109 = vector.shape_cast %108 : vector<1x8x9xf32> to vector<8x9xf32>
    %110 = vector.broadcast %103 : vector<8x1xf32> to vector<8x9xf32>
    %111 = arith.mulf %110, %109 : vector<8x9xf32>
    %112 = arith.addf %111, %107 : vector<8x9xf32>
    %c3_80 = arith.constant 3 : index
    %c0_81 = arith.constant 0 : index
    %c0_82 = arith.constant 0 : index
    %113 = vector.load %arg10[%c3_80, %c0_81, %c0_82] : memref<4x8x9xf32, #tpu.memory_space<vmem>>, vector<1x8x9xf32>
    %114 = vector.shape_cast %113 : vector<1x8x9xf32> to vector<8x9xf32>
    %115 = vector.shape_cast %112 : vector<8x9xf32> to vector<1x8x9xf32>
    tpu.vector_store %arg10[%c3_80, %c0_81, %c0_82], %115 {strides = array<i32>} : memref<4x8x9xf32, #tpu.memory_space<vmem>>, vector<1x8x9xf32>,
    %c3_83 = arith.constant 3 : index
    %c0_84 = arith.constant 0 : index
    %c0_85 = arith.constant 0 : index
    %116 = vector.load %arg9[%c3_83, %c0_84, %c0_85] : memref<4x8x1xf32, #tpu.memory_space<vmem>>, vector<1x8x1xf32>
    %117 = vector.shape_cast %116 : vector<1x8x1xf32> to vector<8x1xf32>
    %118 = vector.shape_cast %101 : vector<8x1xf32> to vector<1x8x1xf32>
    tpu.vector_store %arg9[%c3_83, %c0_84, %c0_85], %118 {strides = array<i32>} : memref<4x8x1xf32, #tpu.memory_space<vmem>>, vector<1x8x1xf32>,
    %c0_i32_86 = arith.constant 0 : i32
    %119 = arith.cmpi eq, %arg2, %c0_i32_86 : i32
    %120 = arith.extui %119 : i1 to i32
    %c0_i32_87 = arith.constant 0 : i32
    %121 = arith.cmpi ne, %120, %c0_i32_87 : i32
    scf.if %121 {
      %c0_88 = arith.constant 0 : index
      %c0_89 = arith.constant 0 : index
      %c0_90 = arith.constant 0 : index
      %122 = vector.load %arg10[%c0_88, %c0_89, %c0_90] : memref<4x8x9xf32, #tpu.memory_space<vmem>>, vector<1x8x9xf32>
      %123 = vector.shape_cast %122 : vector<1x8x9xf32> to vector<8x9xf32>
      %124 = vector.extract_strided_slice %123 {offsets = [0, 8], sizes = [8, 1], strides = [1, 1]} : vector<8x9xf32> to vector<8x1xf32>
      %125 = tpu.reciprocal %124 {approx = true} : vector<8x1xf32> -> vector<8x1xf32>
      %126 = vector.extract_strided_slice %123 {offsets = [0, 0], sizes = [8, 8], strides = [1, 1]} : vector<8x9xf32> to vector<8x8xf32>
      %127 = vector.broadcast %125 : vector<8x1xf32> to vector<8x8xf32>
      %128 = arith.mulf %126, %127 : vector<8x8xf32>
      %c1_91 = arith.constant 1 : index
      %c0_92 = arith.constant 0 : index
      %c0_93 = arith.constant 0 : index
      %129 = vector.load %arg10[%c1_91, %c0_92, %c0_93] : memref<4x8x9xf32, #tpu.memory_space<vmem>>, vector<1x8x9xf32>
      %130 = vector.shape_cast %129 : vector<1x8x9xf32> to vector<8x9xf32>
      %131 = vector.extract_strided_slice %130 {offsets = [0, 8], sizes = [8, 1], strides = [1, 1]} : vector<8x9xf32> to vector<8x1xf32>
      %132 = tpu.reciprocal %131 {approx = true} : vector<8x1xf32> -> vector<8x1xf32>
      %133 = vector.extract_strided_slice %130 {offsets = [0, 0], sizes = [8, 8], strides = [1, 1]} : vector<8x9xf32> to vector<8x8xf32>
      %134 = vector.broadcast %132 : vector<8x1xf32> to vector<8x8xf32>
      %135 = arith.mulf %133, %134 : vector<8x8xf32>
      %c2_94 = arith.constant 2 : index
      %c0_95 = arith.constant 0 : index
      %c0_96 = arith.constant 0 : index
      %136 = vector.load %arg10[%c2_94, %c0_95, %c0_96] : memref<4x8x9xf32, #tpu.memory_space<vmem>>, vector<1x8x9xf32>
      %137 = vector.shape_cast %136 : vector<1x8x9xf32> to vector<8x9xf32>
      %138 = vector.extract_strided_slice %137 {offsets = [0, 8], sizes = [8, 1], strides = [1, 1]} : vector<8x9xf32> to vector<8x1xf32>
      %139 = tpu.reciprocal %138 {approx = true} : vector<8x1xf32> -> vector<8x1xf32>
      %140 = vector.extract_strided_slice %137 {offsets = [0, 0], sizes = [8, 8], strides = [1, 1]} : vector<8x9xf32> to vector<8x8xf32>
      %141 = vector.broadcast %139 : vector<8x1xf32> to vector<8x8xf32>
      %142 = arith.mulf %140, %141 : vector<8x8xf32>
      %c3_97 = arith.constant 3 : index
      %c0_98 = arith.constant 0 : index
      %c0_99 = arith.constant 0 : index
      %143 = vector.load %arg10[%c3_97, %c0_98, %c0_99] : memref<4x8x9xf32, #tpu.memory_space<vmem>>, vector<1x8x9xf32>
      %144 = vector.shape_cast %143 : vector<1x8x9xf32> to vector<8x9xf32>
      %145 = vector.extract_strided_slice %144 {offsets = [0, 8], sizes = [8, 1], strides = [1, 1]} : vector<8x9xf32> to vector<8x1xf32>
      %146 = tpu.reciprocal %145 {approx = true} : vector<8x1xf32> -> vector<8x1xf32>
      %147 = vector.extract_strided_slice %144 {offsets = [0, 0], sizes = [8, 8], strides = [1, 1]} : vector<8x9xf32> to vector<8x8xf32>
      %148 = vector.broadcast %146 : vector<8x1xf32> to vector<8x8xf32>
      %149 = arith.mulf %147, %148 : vector<8x8xf32>
      %150 = tpu.concatenate %128, %135, %142, %149 in 1 : vector<8x8xf32>, vector<8x8xf32>, vector<8x8xf32>, vector<8x8xf32> -> vector<8x32xf32>
      %c0_100 = arith.constant 0 : index
      %c0_101 = arith.constant 0 : index
      %151 = vector.load %arg6[%c0_100, %c0_101] : memref<32x32xf32, #tpu.memory_space<vmem>>, vector<32x32xf32>
      %cst_102 = arith.constant dense<0.000000e+00> : vector<8x32xf32>
      %152 = tpu.matmul %150, %151, %cst_102 {dimension_numbers = #tpu.dot_dimension_numbers<[1], [1], [0], [0], [0, 0, 1, 0], [], []>} : vector<8x32xf32>, vector<32x32xf32>, vector<8x32xf32> -> vector<8x32xf32>
      %c0_103 = arith.constant 0 : index
      %c0_104 = arith.constant 0 : index
      %153 = vector.load %arg7[%c0_103, %c0_104] : memref<1x32xf32, #tpu.memory_space<vmem>>, vector<1x32xf32>
      %154 = vector.broadcast %153 : vector<1x32xf32> to vector<8x32xf32>
      %155 = arith.addf %152, %154 : vector<8x32xf32>
      %c0_105 = arith.constant 0 : index
      %c0_106 = arith.constant 0 : index
      %c0_107 = arith.constant 0 : index
      %156 = vector.load %arg8[%c0_105, %c0_106, %c0_107] : memref<1x8x32xf32, #tpu.memory_space<vmem>>, vector<1x8x32xf32>
      %157 = vector.shape_cast %156 : vector<1x8x32xf32> to vector<8x32xf32>
      %158 = vector.shape_cast %155 : vector<8x32xf32> to vector<1x8x32xf32>
      tpu.vector_store %arg8[%c0_105, %c0_106, %c0_107], %158 {strides = array<i32>} : memref<1x8x32xf32, #tpu.memory_space<vmem>>, vector<1x8x32xf32>,
    } else {
    }
    return
  }
  func.func @transform_0(%arg0: i32, %arg1: i32, %arg2: i32) -> (i32, i32, i32) {
    %c0_i32 = arith.constant 0 : i32
    %c0_i32_0 = arith.constant 0 : i32
    return %arg0, %arg1, %c0_i32 : i32, i32, i32
  }
  func.func @transform_1(%arg0: i32, %arg1: i32, %arg2: i32) -> (i32, i32, i32) {
    %c0_i32 = arith.constant 0 : i32
    %c0_i32_0 = arith.constant 0 : i32
    return %arg0, %arg2, %c0_i32 : i32, i32, i32
  }
  func.func @transform_2(%arg0: i32, %arg1: i32, %arg2: i32) -> (i32, i32, i32) {
    %c0_i32 = arith.constant 0 : i32
    %c0_i32_0 = arith.constant 0 : i32
    return %arg0, %arg2, %c0_i32 : i32, i32, i32
  }
  func.func @transform_3(%arg0: i32, %arg1: i32, %arg2: i32) -> (i32, i32) {
    %c0_i32 = arith.constant 0 : i32
    %c0_i32_0 = arith.constant 0 : i32
    %c0_i32_1 = arith.constant 0 : i32
    return %c0_i32, %c0_i32_0 : i32, i32
  }
  func.func @transform_4(%arg0: i32, %arg1: i32, %arg2: i32) -> (i32, i32) {
    %c0_i32 = arith.constant 0 : i32
    %c0_i32_0 = arith.constant 0 : i32
    %c0_i32_1 = arith.constant 0 : i32
    return %c0_i32, %c0_i32_0 : i32, i32
  }
  func.func @transform_5(%arg0: i32, %arg1: i32, %arg2: i32) -> (i32, i32, i32) {
    %c0_i32 = arith.constant 0 : i32
    %c0_i32_0 = arith.constant 0 : i32
    return %arg0, %arg1, %c0_i32 : i32, i32, i32
  }
}

</mosaic_0001>

<llo_original>
// kernel: attention_forward.2
$region0: #{attention_forward.2}
  #allocation0 [shape = 'u32[]', space=smem, size = 0x4, offset = 0x4, fixed_abs, tag = 'smem constant byte address 0x4 - core index']
  #allocation1 [shape = 'u32[144,128]{1,0:T(1,128)}', space=vmem, size = 0x12000, scoped, tag = 'internal scratch']
  %s0 = inlined_call_operand.vmem [shape: f32[16,32], index: 0, kind: input, shape index: {}]
  %s1 = inlined_call_operand.vmem [shape: f32[100,32], index: 1, kind: input, shape index: {}]
  %s2 = inlined_call_operand.vmem [shape: f32[1,100], index: 2, kind: input, shape index: {}]
  %s3 = inlined_call_operand.vmem [shape: f32[16,32], index: 3, kind: output, shape index: {0}]
  %s4 = inlined_call_operand.vmem [shape: f32[16,32], index: 4, kind: output, shape index: {1}]
  %s5 = inlined_call_operand.vmem [shape: f32[16,36], index: 5, kind: output, shape index: {2}]
  %6 = xla_tuple %s3, %s4, %s5
  %s7 = sld [smem:[#allocation0]]
  $region38: #{attention_forward.2} parent=0
    _
  %s9 = ssub.s32 1, %s7
  %s10 = scalar_select 0, %s9, %s7
  // Predicated region
  $region2: #{attention_forward.2} parent=0 // pred_check
    _
  $region3: #{attention_forward.2} parent=0 // pred_check_branch
    %12 = sbr.rel (0) target = $region5
  $region4: #{attention_forward.2} parent=0 // pred_region
    _
  $region5: #{attention_forward.2} parent=0 // pred_fallthru
    _
  // Predicated region
  $region6: #{attention_forward.2} parent=0 // pred_check
    _
  $region7: #{attention_forward.2} parent=0 // pred_check_branch
    %14 = sbr.rel (0) target = $region9
  $region8: #{attention_forward.2} parent=0 // pred_region
    _
  $region9: #{attention_forward.2} parent=0 // pred_fallthru
    _
  // Predicated region
  $region10: #{attention_forward.2} parent=0 // pred_check
    _
  $region11: #{attention_forward.2} parent=0 // pred_check_branch
    %16 = sbr.rel (0) target = $region13
  $region12: #{attention_forward.2} parent=0 // pred_region
    _
  $region13: #{attention_forward.2} parent=0 // pred_fallthru
    _
  %v17 = vld [vmem:[%s0] sm:$0xff]
  %v18 = vld [vmem:[%s0 + $0x8] sm:$0xff]
  %v19 = vld [vmem:[%s1] sm:$0xff]
  %v20 = vld [vmem:[%s1 + $0x8] sm:$0xff]
  %v21 = vld [vmem:[%s1 + $0x10] sm:$0xff]
  %v22 = vld [vmem:[%s1 + $0x18] sm:$0xff]
  %v23 = vld [vmem:[%s1 + $0x20] sm:$0xff]
  %v24 = vld [vmem:[%s1 + $0x28] sm:$0xff]
  %v25 = vld [vmem:[%s1 + $0x30] sm:$0xff]
  %v26 = vld [vmem:[%s1 + $0x38] sm:$0xff]
  %v27 = vld [vmem:[%s1 + $0x40] sm:$0xff]
  %v28 = vld [vmem:[%s1 + $0x48] sm:$0xff]
  %v29 = vld [vmem:[%s1 + $0x50] sm:$0xff]
  %v30 = vld [vmem:[%s1 + $0x58] sm:$0xff]
  %v31 = vld [vmem:[%s1 + $0x60] sm:$0xf]
  %v32 = vld [vmem:[%s2] sm:$0x1]
  %v34 = vlaneseq
  %v35 = vshrl.u32 %v34, 7
  %v36 = vsub.s32 0, %v35
  %v37 = vrot.slane %v32, %v36
  %vm39 = vcmask 261120
  %v41 = vsel %vm39, %v17, 0
  %v44 = vsel %vm39, %v18, 0
  %v47 = vsel %vm39, %v19, 0
  %v50 = vsel %vm39, %v20, 0
  %v53 = vsel %vm39, %v21, 0
  %v56 = vsel %vm39, %v22, 0
  %v59 = vsel %vm39, %v23, 0
  %v62 = vsel %vm39, %v24, 0
  %v65 = vsel %vm39, %v25, 0
  %v68 = vsel %vm39, %v26, 0
  %v71 = vsel %vm39, %v27, 0
  %v74 = vsel %vm39, %v28, 0
  %v77 = vsel %vm39, %v29, 0
  %v80 = vsel %vm39, %v30, 0
  %v83 = vsel %vm39, %v31, 0
  %85 = vmatprep.subr.mxu0 0.0
  %86 = vmatpush1.xpose.msra.mxu0 %v47
  %87 = vmatprep.subr.mxu0 0.0
  %88 = vmatpush1.xpose.msra.mxu0 %v50
  %89 = vmatprep.subr.mxu0 0.0
  %90 = vmatpush1.xpose.msra.mxu0 %v53
  %91 = vmatprep.subr.mxu0 0.0
  %92 = vmatpush1.xpose.msra.mxu0 %v56
  %93 = vmatprep.subr.mxu0 0.0
  %94 = vmatpush1.xpose.msra.mxu0 %v59
  %95 = vmatprep.subr.mxu0 0.0
  %96 = vmatpush1.xpose.msra.mxu0 %v62
  %97 = vmatprep.subr.mxu0 0.0
  %98 = vmatpush1.xpose.msra.mxu0 %v65
  %99 = vmatprep.subr.mxu0 0.0
  %100 = vmatpush1.xpose.msra.mxu0 %v68
  %101 = vmatprep.subr.mxu0 0.0
  %102 = vmatpush1.xpose.msra.mxu0 %v71
  %103 = vmatprep.subr.mxu0 0.0
  %104 = vmatpush1.xpose.msra.mxu0 %v74
  %105 = vmatprep.subr.mxu0 0.0
  %106 = vmatpush1.xpose.msra.mxu0 %v77
  %107 = vmatprep.subr.mxu0 0.0
  %108 = vmatpush1.xpose.msra.mxu0 %v80
  %109 = vmatprep.subr.mxu0 0.0
  %110 = vmatpush1.xpose.msra.mxu0 %v83
  %111 = vmatprep.subr.mxu0 0.0
  %112 = vmatpush1.xpose.msra.mxu0 0.0
  %113 = vmatprep.subr.mxu0 0.0
  %114 = vmatpush1.xpose.msra.mxu0 0.0
  %115 = vmatprep.subr.mxu0 0.0
  %116 = vmatpush1.xpose.msra.mxu0 0.0
  %117 = vmatprep.subr.mxu0 0.0
  %118 = vmatpush1.xpose.msra.mxu0 0.0
  %119 = vmatprep.subr.mxu0 0.0
  %120 = vmatpush1.xpose.msra.mxu0 0.0
  %121 = vmatprep.subr.mxu0 0.0
  %122 = vmatpush1.xpose.msra.mxu0 0.0
  %123 = vmatprep.subr.mxu0 0.0
  %124 = vmatpush1.xpose.msra.mxu0 0.0
  %125 = vmatprep.subr.mxu0 0.0
  %126 = vmatpush1.xpose.msra.mxu0 0.0
  %127 = vmatprep.subr.mxu0 0.0
  %128 = vmatpush1.xpose.msra.mxu0 0.0
  %129 = vmatprep.subr.mxu0 0.0
  %130 = vmatpush1.xpose.msra.mxu0 0.0
  %131 = vmatprep.subr.mxu0 0.0
  %132 = vmatpush1.xpose.msra.mxu0 0.0
  %133 = vmatprep.subr.mxu0 0.0
  %134 = vmatpush1.xpose.msra.mxu0 0.0
  %135 = vmatprep.subr.mxu0 0.0
  %136 = vmatpush1.xpose.msra.mxu0 0.0
  %137 = vmatprep.subr.mxu0 0.0
  %138 = vmatpush1.xpose.msra.mxu0 0.0
  %139 = vmatprep.subr.mxu0 0.0
  %140 = vmatpush1.xpose.msra.mxu0 0.0
  %141 = vmatprep.subr.mxu0 0.0
  %142 = vmatpush1.xpose.msra.mxu0 0.0
  %143 = vmatprep.subr.mxu0 0.0
  %144 = vmatpush1.xpose.msra.mxu0 0.0
  %145 = vmatprep.subr.mxu0 0.0
  %146 = vmatpush1.xpose.msra.mxu0 0.0
  %147 = vmatprep.subr.mxu0 0.0
  %148 = vmatpush1.xpose.msra.mxu0 0.0
  %149 = vmatprep.mubr.f32.mxu0 0.0
  %150 = vmatmul.mubr.f32.gmra.mrb[0].mxu0 %v41
  %v151 = vpop.f32.mrb[0].mxu0
  %v152 = vadd.f32 %v37, %v151
  %v153 = vpop.f32.mrb[0].mxu0
  %154 = vmatprep.mubr.f32.mxu0 0.0
  %155 = vmatmul.mubr.f32.gmra.mrb[0].mxu0 %v44
  %v156 = vpop.f32.mrb[0].mxu0
  %v157 = vadd.f32 %v37, %v156
  %v158 = vpop.f32.mrb[0].mxu0
  %159 = vdwg.mxu0
  %160 = vst.msk [vmem:[%s3] sm:$0xff] %vm39, %v152
  %161 = vst.msk [vmem:[%s3 + $0x8] sm:$0xff] %vm39, %v157
  %164 = vrot.lane.b32.xlu0 %v152, 96
  %v165 = vpop.permute.xlu0 %164
  %166 = vrot.lane.b32.xlu0 %v157, 96
  %v167 = vpop.permute.xlu0 %166
  %170 = vst.msk [vmem:[%s4] sm:$0xff] %vm39, %v165
  %171 = vst.msk [vmem:[%s4 + $0x8] sm:$0xff] %vm39, %v167
  %172 = vrot.lane.b32.xlu0 %v152, 64
  %v173 = vpop.permute.xlu0 %172
  %174 = vrot.lane.b32.xlu0 %v157, 64
  %v175 = vpop.permute.xlu0 %174
  %vm178 = vcmask 293888
  %179 = vst.msk [vmem:[%s5] sm:$0xff] %vm178, %v173
  %180 = vst.msk [vmem:[%s5 + $0x8] sm:$0xff] %vm178, %v175
  // Predicated region
  $region14: #{attention_forward.2} parent=0 // pred_check
    _
  $region15: #{attention_forward.2} parent=0 // pred_check_branch
    %182 = sbr.rel (0) target = $region17
  $region16: #{attention_forward.2} parent=0 // pred_region
    _
  $region17: #{attention_forward.2} parent=0 // pred_fallthru
    _
  // Predicated region
  $region18: #{attention_forward.2} parent=0 // pred_check
    _
  $region19: #{attention_forward.2} parent=0 // pred_check_branch
    %184 = sbr.rel (0) target = $region21
  $region20: #{attention_forward.2} parent=0 // pred_region
    _
  $region21: #{attention_forward.2} parent=0 // pred_fallthru
    _
  // Predicated region
  $region22: #{attention_forward.2} parent=0 // pred_check
    _
  $region23: #{attention_forward.2} parent=0 // pred_check_branch
    %186 = sbr.rel (0) target = $region25
  $region24: #{attention_forward.2} parent=0 // pred_region
    _
  $region25: #{attention_forward.2} parent=0 // pred_fallthru
    _
  // Predicated region
  $region26: #{attention_forward.2} parent=0 // pred_check
    _
  $region27: #{attention_forward.2} parent=0 // pred_check_branch
    %188 = sbr.rel (0) target = $region29
  $region28: #{attention_forward.2} parent=0 // pred_region
    _
  $region29: #{attention_forward.2} parent=0 // pred_fallthru
    _
  // Predicated region
  $region30: #{attention_forward.2} parent=0 // pred_check
    _
  $region31: #{attention_forward.2} parent=0 // pred_check_branch
    %190 = sbr.rel (0) target = $region33
  $region32: #{attention_forward.2} parent=0 // pred_region
    _
  $region33: #{attention_forward.2} parent=0 // pred_fallthru
    _
  // Predicated region
  $region34: #{attention_forward.2} parent=0 // pred_check
    _
  $region35: #{attention_forward.2} parent=0 // pred_check_branch
    %192 = sbr.rel (0) target = $region37
  $region36: #{attention_forward.2} parent=0 // pred_region
    _
  $region37: #{attention_forward.2} parent=0 // pred_fallthru
    _

// kernel: attention_forward.3
$region0: #{attention_forward.3}
  #allocation0 [shape = 'u32[]', space=smem, size = 0x4, offset = 0x4, fixed_abs, tag = 'smem constant byte address 0x4 - core index']
  #allocation1 [shape = 'u32[144,128]{1,0:T(1,128)}', space=vmem, size = 0x12000, scoped, tag = 'internal scratch']
  #allocation2 [shape = 'f32[4,8,1]{2,1,0:T(8,128)}', space=vmem, size = 0x4000, scoped, tag = 'scratch operand']
  #allocation3 [shape = 'f32[4,8,9]{2,1,0:T(8,128)}', space=vmem, size = 0x4000, scoped, tag = 'scratch operand']
  %s0 = inlined_call_operand.vmem [shape: f32[2,8,32], index: 0, kind: input, shape index: {}]
  %s1 = inlined_call_operand.vmem [shape: f32[2,8,32], index: 1, kind: input, shape index: {}]
  %s2 = inlined_call_operand.vmem [shape: f32[2,8,36], index: 2, kind: input, shape index: {}]
  %s3 = inlined_call_operand.vmem [shape: f32[32,32], index: 3, kind: input, shape index: {}]
  %s4 = inlined_call_operand.vmem [shape: f32[1,32], index: 4, kind: input, shape index: {}]
  %s5 = inlined_call_operand.hbm [shape: f32[2,8,32], index: 5, kind: output, shape index: {}]
  %s6 = sld [smem:[#allocation0]]
  $region61: #{attention_forward.3} parent=0
    _
  %s8 = ssub.s32 1, %s6
  %s9 = scalar_select 0, %s8, %s6
  $region1: #{attention_forward.3} parent=0
    #allocation4 [shape = 'u8[8192]{0}', space=vmem, size = 0x2000, scoped, tag = 'output window, operand 0']
    #allocation5 [shape = 's32[2]{0}', space=sflag, size = 0x8, scoped, tag = 'scoped memory for attention_forward.3']
    %10 = vsyncpa [#allocation5], 0
    %s11 = scalar_lea.sflag [#allocation5], 1
    %12 = vsyncpa %s11, 0
    loop: start=0, step=1, limit=4
    $region2: #{attention_forward.3} parent=1 // loop_pre_header
      _
    $region3: #{attention_forward.3} parent=1 // loop_header
      %s14 = sphi 0, %s18
      %p15 = scmp.ge.s32.totalorder %s14, 4
      %s21 = sphi 0, %s40
      %s22 = sphi 0, %s36
      %s23 = sphi 0, %s32
      %s24 = sphi 0, %s21
      %s25 = sphi 0, %s22
      %s26 = sphi 0, %s23
      %s27 = sphi 0, %s24
      %s28 = sphi 0, %s25
      %s29 = sphi 0, %s26
      %s45 = sphi 0, %s47
      %s48 = sphi 0, %s45
      %s49 = sphi 0, %s48
      %s65 = sphi 0, %s49
      %s73 = sphi 0, %s75
      %s76 = sphi 0, %s73
      %s77 = sphi 0, %s76
      %s93 = sphi 0, %s77
      %s101 = sphi 0, %s103
      %s104 = sphi 0, %s101
      %s105 = sphi 0, %s104
      %s121 = sphi 0, %s105
      %s125 = sphi 0, %s125
      %s127 = sphi 0, %s125
      %s128 = sphi 0, %s127
      %s142 = sphi 0, %s128
      %s146 = sphi 0, %s146
      %s148 = sphi 0, %s146
      %s149 = sphi 0, %s148
      %s163 = sphi 0, %s149
      %s171 = sphi 0, %s173
      %s174 = sphi 0, %s171
      %s175 = sphi 0, %s174
      %s191 = sphi 0, %s175
    $region4: #{attention_forward.3} parent=1 // loop_header_branch
      %17 = sbr.rel (%p15) target = $region8
    $region5: #{attention_forward.3} parent=1 // loop_body
      %s19 = ssub.s32 %s14, 1
      %s20 = ssub.s32 %s14, 2
      %s30 = sadd.s32 1, %s23
      %p31 = scmp.ge.s32.totalorder %s30, 1
      %s32 = scalar_select %p31, 0, %s30
      %s33 = sadd.s32 1, %s22
      %s34 = scalar_select %p31, %s33, %s22
      %p35 = scmp.ge.s32.totalorder %s34, 1
      %s36 = scalar_select %p35, 0, %s34
      %s37 = sadd.s32 1, %s21
      %s38 = scalar_select %p35, %s37, %s21
      %p39 = scmp.ge.s32.totalorder %s38, 2
      %s40 = scalar_select %p39, 0, %s38
      %s41 = ssub.s32 %s21, %s40
      %s42 = ssub.s32 %s22, %s36
      %s43 = sor.u32 %s41, %s42
      %p44 = scmp.eq.s32.totalorder %s43, 0
      %s46 = sadd.s32 %s45, 1
      %s47 = scalar_select %p44, %s45, %s46
      %p50 = pneg %p44
      %p51 = scmp.eq.s32.totalorder %s14, 1
      %p52 = por %p50, %p51
      %p53 = scmp.ne.s32.totalorder %s45, %s48
      %p54 = scmp.eq.s32.totalorder %s14, 0
      %p55 = por %p53, %p54
      %p56 = scmp.ne.s32.totalorder %s45, %s48
      %p57 = scmp.eq.s32.totalorder %s19, 1
      %p58 = por %p56, %p57
      %p59 = scmp.ne.s32.totalorder %s48, %s49
      %p60 = scmp.eq.s32.totalorder %s19, 0
      %p61 = por %p59, %p60
      %p62 = scmp.ne.s32.totalorder %s48, %s49
      %p63 = scmp.eq.s32.totalorder %s20, 1
      %p64 = por %p62, %p63
      %p66 = scmp.ne.s32.totalorder %s49, %s65
      %p67 = scmp.eq.s32.totalorder %s20, 0
      %p68 = por %p66, %p67
      %s69 = ssub.s32 %s21, %s40
      %s70 = ssub.s32 %s23, %s32
      %s71 = sor.u32 %s69, %s70
      %p72 = scmp.eq.s32.totalorder %s71, 0
      %s74 = sadd.s32 %s73, 1
      %s75 = scalar_select %p72, %s73, %s74
      %p78 = pneg %p72
      %p79 = scmp.eq.s32.totalorder %s14, 1
      %p80 = por %p78, %p79
      %p81 = scmp.ne.s32.totalorder %s73, %s76
      %p82 = scmp.eq.s32.totalorder %s14, 0
      %p83 = por %p81, %p82
      %p84 = scmp.ne.s32.totalorder %s73, %s76
      %p85 = scmp.eq.s32.totalorder %s19, 1
      %p86 = por %p84, %p85
      %p87 = scmp.ne.s32.totalorder %s76, %s77
      %p88 = scmp.eq.s32.totalorder %s19, 0
      %p89 = por %p87, %p88
      %p90 = scmp.ne.s32.totalorder %s76, %s77
      %p91 = scmp.eq.s32.totalorder %s20, 1
      %p92 = por %p90, %p91
      %p94 = scmp.ne.s32.totalorder %s77, %s93
      %p95 = scmp.eq.s32.totalorder %s20, 0
      %p96 = por %p94, %p95
      %s97 = ssub.s32 %s21, %s40
      %s98 = ssub.s32 %s23, %s32
      %s99 = sor.u32 %s97, %s98
      %p100 = scmp.eq.s32.totalorder %s99, 0
      %s102 = sadd.s32 %s101, 1
      %s103 = scalar_select %p100, %s101, %s102
      %p106 = pneg %p100
      %p107 = scmp.eq.s32.totalorder %s14, 1
      %p108 = por %p106, %p107
      %p109 = scmp.ne.s32.totalorder %s101, %s104
      %p110 = scmp.eq.s32.totalorder %s14, 0
      %p111 = por %p109, %p110
      %p112 = scmp.ne.s32.totalorder %s101, %s104
      %p113 = scmp.eq.s32.totalorder %s19, 1
      %p114 = por %p112, %p113
      %p115 = scmp.ne.s32.totalorder %s104, %s105
      %p116 = scmp.eq.s32.totalorder %s19, 0
      %p117 = por %p115, %p116
      %p118 = scmp.ne.s32.totalorder %s104, %s105
      %p119 = scmp.eq.s32.totalorder %s20, 1
      %p120 = por %p118, %p119
      %p122 = scmp.ne.s32.totalorder %s105, %s121
      %p123 = scmp.eq.s32.totalorder %s20, 0
      %p124 = por %p122, %p123
      %s126 = sadd.s32 %s125, 1
      %p129 = scmp.eq.s32.totalorder %s14, 1
      %p130 = scmp.ne.s32.totalorder %s125, %s127
      %p131 = scmp.eq.s32.totalorder %s14, 0
      %p132 = por %p130, %p131
      %p133 = scmp.ne.s32.totalorder %s125, %s127
      %p134 = scmp.eq.s32.totalorder %s19, 1
      %p135 = por %p133, %p134
      %p136 = scmp.ne.s32.totalorder %s127, %s128
      %p137 = scmp.eq.s32.totalorder %s19, 0
      %p138 = por %p136, %p137
      %p139 = scmp.ne.s32.totalorder %s127, %s128
      %p140 = scmp.eq.s32.totalorder %s20, 1
      %p141 = por %p139, %p140
      %p143 = scmp.ne.s32.totalorder %s128, %s142
      %p144 = scmp.eq.s32.totalorder %s20, 0
      %p145 = por %p143, %p144
      %s147 = sadd.s32 %s146, 1
      %p150 = scmp.eq.s32.totalorder %s14, 1
      %p151 = scmp.ne.s32.totalorder %s146, %s148
      %p152 = scmp.eq.s32.totalorder %s14, 0
      %p153 = por %p151, %p152
      %p154 = scmp.ne.s32.totalorder %s146, %s148
      %p155 = scmp.eq.s32.totalorder %s19, 1
      %p156 = por %p154, %p155
      %p157 = scmp.ne.s32.totalorder %s148, %s149
      %p158 = scmp.eq.s32.totalorder %s19, 0
      %p159 = por %p157, %p158
      %p160 = scmp.ne.s32.totalorder %s148, %s149
      %p161 = scmp.eq.s32.totalorder %s20, 1
      %p162 = por %p160, %p161
      %p164 = scmp.ne.s32.totalorder %s149, %s163
      %p165 = scmp.eq.s32.totalorder %s20, 0
      %p166 = por %p164, %p165
      %s167 = ssub.s32 %s21, %s40
      %s168 = ssub.s32 %s22, %s36
      %s169 = sor.u32 %s167, %s168
      %p170 = scmp.eq.s32.totalorder %s169, 0
      %s172 = sadd.s32 %s171, 1
      %s173 = scalar_select %p170, %s171, %s172
      %p176 = pneg %p170
      %p177 = scmp.eq.s32.totalorder %s14, 1
      %p178 = por %p176, %p177
      %p179 = scmp.ne.s32.totalorder %s171, %s174
      %p180 = scmp.eq.s32.totalorder %s14, 0
      %p181 = por %p179, %p180
      %p182 = scmp.ne.s32.totalorder %s171, %s174
      %p183 = scmp.eq.s32.totalorder %s19, 1
      %p184 = por %p182, %p183
      %p185 = scmp.ne.s32.totalorder %s174, %s175
      %p186 = scmp.eq.s32.totalorder %s19, 0
      %p187 = por %p185, %p186
      %p188 = scmp.ne.s32.totalorder %s174, %s175
      %p189 = scmp.eq.s32.totalorder %s20, 1
      %p190 = por %p188, %p189
      %p192 = scmp.ne.s32.totalorder %s175, %s191
      %p193 = scmp.eq.s32.totalorder %s20, 0
      %p194 = por %p192, %p193
      %p195 = scmp.le.s32.totalorder 1, %s14
      %p196 = scmp.lt.s32.totalorder %s14, 3
      %p197 = pnand %p195, %p196
      %p198 = pneg %p197
      // Predicated region
      $region9: #{attention_forward.3} parent=5 // pred_check
        _
      $region10: #{attention_forward.3} parent=5 // pred_check_branch
        %200 = sbr.rel (%p197) target = $region12
      $region11: #{attention_forward.3} parent=5 // pred_region
        %s201 = ssub.s32 %s14, 1
        // Predicated region
        $region13: #{attention_forward.3} parent=11 // pred_check
          %p202 = pneg %p138
        $region14: #{attention_forward.3} parent=11 // pred_check_branch
          %204 = sbr.rel (%p202) target = $region16
        $region15: #{attention_forward.3} parent=11 // pred_region
          _
        $region16: #{attention_forward.3} parent=11 // pred_fallthru
          _
        // Predicated region
        $region17: #{attention_forward.3} parent=11 // pred_check
          %p205 = pneg %p159
        $region18: #{attention_forward.3} parent=11 // pred_check_branch
          %207 = sbr.rel (%p205) target = $region20
        $region19: #{attention_forward.3} parent=11 // pred_region
          _
        $region20: #{attention_forward.3} parent=11 // pred_fallthru
          _
      $region12: #{attention_forward.3} parent=5 // pred_fallthru
        _
      %p208 = scmp.lt.s32.totalorder %s14, 2
      // Predicated region
      $region21: #{attention_forward.3} parent=5 // pred_check
        %p209 = pneg %p208
      $region22: #{attention_forward.3} parent=5 // pred_check_branch
        %211 = sbr.rel (%p209) target = $region24
      $region23: #{attention_forward.3} parent=5 // pred_region
        // Predicated region
        $region25: #{attention_forward.3} parent=23 // pred_check
          %p212 = pneg %p55
        $region26: #{attention_forward.3} parent=23 // pred_check_branch
          %214 = sbr.rel (%p212) target = $region28
        $region27: #{attention_forward.3} parent=23 // pred_region
          %p215 = scmp.lt.s32.totalorder %s21, 1
          %s216 = scalar_select %p215, %s21, 1
          %p217 = scmp.lt.s32.totalorder %s22, 0
          %s218 = scalar_select %p217, %s22, 0
          %s219 = sadd.s32 %s218, %s216
          %s220 = smul.addr %s219, 8
          %s221 = scalar_lea.vmem %s0, %s220
        $region28: #{attention_forward.3} parent=23 // pred_fallthru
          _
        // Predicated region
        $region29: #{attention_forward.3} parent=23 // pred_check
          %p222 = pneg %p83
        $region30: #{attention_forward.3} parent=23 // pred_check_branch
          %224 = sbr.rel (%p222) target = $region32
        $region31: #{attention_forward.3} parent=23 // pred_region
          %p225 = scmp.lt.s32.totalorder %s21, 1
          %s226 = scalar_select %p225, %s21, 1
          %p227 = scmp.lt.s32.totalorder %s23, 0
          %s228 = scalar_select %p227, %s23, 0
          %s229 = sadd.s32 %s228, %s226
          %s230 = smul.addr %s229, 8
          %s231 = scalar_lea.vmem %s1, %s230
        $region32: #{attention_forward.3} parent=23 // pred_fallthru
          _
        // Predicated region
        $region33: #{attention_forward.3} parent=23 // pred_check
          %p232 = pneg %p111
        $region34: #{attention_forward.3} parent=23 // pred_check_branch
          %234 = sbr.rel (%p232) target = $region36
        $region35: #{attention_forward.3} parent=23 // pred_region
          %p235 = scmp.lt.s32.totalorder %s21, 1
          %s236 = scalar_select %p235, %s21, 1
          %p237 = scmp.lt.s32.totalorder %s23, 0
          %s238 = scalar_select %p237, %s23, 0
          %s239 = sadd.s32 %s238, %s236
          %s240 = smul.addr %s239, 8
          %s241 = scalar_lea.vmem %s2, %s240
        $region36: #{attention_forward.3} parent=23 // pred_fallthru
          _
      $region24: #{attention_forward.3} parent=5 // pred_fallthru
        _
      %p242 = scmp.le.s32.totalorder 1, %s14
      %p243 = scmp.lt.s32.totalorder %s14, 3
      %p244 = pnand %p242, %p243
      %p245 = pneg %p244
      // Predicated region
      $region37: #{attention_forward.3} parent=5 // pred_check
        _
      $region38: #{attention_forward.3} parent=5 // pred_check_branch
        %247 = sbr.rel (%p244) target = $region40
      $region39: #{attention_forward.3} parent=5 // pred_region
        %s248 = ssub.s32 %s14, 1
        %p249 = scmp.lt.s32.totalorder %s24, 1
        %s250 = scalar_select %p249, %s24, 1
        %p251 = scmp.lt.s32.totalorder %s25, 0
        %s252 = scalar_select %p251, %s25, 0
        %s253 = sadd.s32 %s252, %s250
        %s254 = smul.addr %s253, 8
        %s255 = scalar_lea.vmem %s0, %s254
        %p256 = pneg %p61
        %p257 = pneg %p58
        %p258 = scmp.lt.s32.totalorder %s24, 1
        %s259 = scalar_select %p258, %s24, 1
        %p260 = scmp.lt.s32.totalorder %s26, 0
        %s261 = scalar_select %p260, %s26, 0
        %s262 = sadd.s32 %s261, %s259
        %s263 = smul.addr %s262, 8
        %s264 = scalar_lea.vmem %s1, %s263
        %p265 = pneg %p89
        %p266 = pneg %p86
        %p267 = scmp.lt.s32.totalorder %s24, 1
        %s268 = scalar_select %p267, %s24, 1
        %p269 = scmp.lt.s32.totalorder %s26, 0
        %s270 = scalar_select %p269, %s26, 0
        %s271 = sadd.s32 %s270, %s268
        %s272 = smul.addr %s271, 8
        %s273 = scalar_lea.vmem %s2, %s272
        %p274 = pneg %p117
        %p275 = pneg %p114
        %p276 = pneg %p138
        %p277 = pneg %p135
        %p278 = pneg %p159
        %p279 = pneg %p156
        %p280 = pneg %p187
        %p281 = pneg %p184
        %s282 = sand.u32 %s174, 1
        %s283 = scalar_lea.sflag [#allocation5], %s282
        %s284 = sand.u32 %s174, 1
        %s285 = smul.addr %s284, 8
        %s286 = scalar_lea.vmem [#allocation4], %s285
        %p287 = scmp.lt.s32.totalorder %s24, 1
        %s288 = scalar_select %p287, %s24, 1
        %p289 = scmp.lt.s32.totalorder %s25, 0
        %s290 = scalar_select %p289, %s25, 0
        %s291 = sadd.s32 %s290, %s288
        %s292 = smul.addr %s291, 8
        %s293 = scalar_lea.vmem %s0, %s292
        %p294 = scmp.lt.s32.totalorder %s24, 1
        %s295 = scalar_select %p294, %s24, 1
        %p296 = scmp.lt.s32.totalorder %s26, 0
        %s297 = scalar_select %p296, %s26, 0
        %s298 = sadd.s32 %s297, %s295
        %s299 = smul.addr %s298, 8
        %s300 = scalar_lea.vmem %s1, %s299
        %p301 = scmp.lt.s32.totalorder %s24, 1
        %s302 = scalar_select %p301, %s24, 1
        %p303 = scmp.lt.s32.totalorder %s26, 0
        %s304 = scalar_select %p303, %s26, 0
        %s305 = sadd.s32 %s304, %s302
        %s306 = smul.addr %s305, 8
        %s307 = scalar_lea.vmem %s2, %s306
        %p308 = scmp.eq.s32.totalorder %s26, 0
        // Predicated region
        $region41: #{attention_forward.3} parent=39 // pred_check
          %p309 = pneg %p308
        $region42: #{attention_forward.3} parent=39 // pred_check_branch
          %311 = sbr.rel (%p309) target = $region44
        $region43: #{attention_forward.3} parent=39 // pred_region
          %vm312 = vcmask 7168
          %313 = vst.msk [vmem:[#allocation2] sm:$0xff] %vm312, -inf
          %314 = vst.msk [vmem:[#allocation2 + $0x8] sm:$0xff] %vm312, -inf
          %315 = vst.msk [vmem:[#allocation2 + $0x10] sm:$0xff] %vm312, -inf
          %316 = vst.msk [vmem:[#allocation2 + $0x18] sm:$0xff] %vm312, -inf
          %vm317 = vcmask 72704
          %318 = vst.msk [vmem:[#allocation3] sm:$0xff] %vm317, 0.0
          %319 = vst.msk [vmem:[#allocation3 + $0x8] sm:$0xff] %vm317, 0.0
          %320 = vst.msk [vmem:[#allocation3 + $0x10] sm:$0xff] %vm317, 0.0
          %321 = vst.msk [vmem:[#allocation3 + $0x18] sm:$0xff] %vm317, 0.0
        $region44: #{attention_forward.3} parent=39 // pred_fallthru
          _
        %v322 = vld [vmem:[%s293] sm:$0xff]
        %v323 = vld [vmem:[%s300] sm:$0xff]
        %v324 = vld [vmem:[%s307] sm:$0xff]
        %vm325 = vcmask 64512
        %v327 = vsel %vm325, %v322, 0
        %v330 = vsel %vm325, %v323, 0
        %332 = vmatprep.subr.mxu0 0.0
        %333 = vmatpush1.xpose.msra.mxu0 %v330
        %334 = vmatprep.subr.mxu0 0.0
        %335 = vmatpush1.xpose.msra.mxu0 0.0
        %336 = vmatprep.subr.mxu0 0.0
        %337 = vmatpush1.xpose.msra.mxu0 0.0
        %338 = vmatprep.subr.mxu0 0.0
        %339 = vmatpush1.xpose.msra.mxu0 0.0
        %340 = vmatprep.subr.mxu0 0.0
        %341 = vmatpush1.xpose.msra.mxu0 0.0
        %342 = vmatprep.subr.mxu0 0.0
        %343 = vmatpush1.xpose.msra.mxu0 0.0
        %344 = vmatprep.subr.mxu0 0.0
        %345 = vmatpush1.xpose.msra.mxu0 0.0
        %346 = vmatprep.subr.mxu0 0.0
        %347 = vmatpush1.xpose.msra.mxu0 0.0
        %348 = vmatprep.subr.mxu0 0.0
        %349 = vmatpush1.xpose.msra.mxu0 0.0
        %350 = vmatprep.subr.mxu0 0.0
        %351 = vmatpush1.xpose.msra.mxu0 0.0
        %352 = vmatprep.subr.mxu0 0.0
        %353 = vmatpush1.xpose.msra.mxu0 0.0
        %354 = vmatprep.subr.mxu0 0.0
        %355 = vmatpush1.xpose.msra.mxu0 0.0
        %356 = vmatprep.subr.mxu0 0.0
        %357 = vmatpush1.xpose.msra.mxu0 0.0
        %358 = vmatprep.subr.mxu0 0.0
        %359 = vmatpush1.xpose.msra.mxu0 0.0
        %360 = vmatprep.subr.mxu0 0.0
        %361 = vmatpush1.xpose.msra.mxu0 0.0
        %362 = vmatprep.subr.mxu0 0.0
        %363 = vmatpush1.xpose.msra.mxu0 0.0
        %364 = vmatprep.subr.mxu0 0.0
        %365 = vmatpush1.xpose.msra.mxu0 0.0
        %366 = vmatprep.subr.mxu0 0.0
        %367 = vmatpush1.xpose.msra.mxu0 0.0
        %368 = vmatprep.subr.mxu0 0.0
        %369 = vmatpush1.xpose.msra.mxu0 0.0
        %370 = vmatprep.subr.mxu0 0.0
        %371 = vmatpush1.xpose.msra.mxu0 0.0
        %372 = vmatprep.subr.mxu0 0.0
        %373 = vmatpush1.xpose.msra.mxu0 0.0
        %374 = vmatprep.subr.mxu0 0.0
        %375 = vmatpush1.xpose.msra.mxu0 0.0
        %376 = vmatprep.subr.mxu0 0.0
        %377 = vmatpush1.xpose.msra.mxu0 0.0
        %378 = vmatprep.subr.mxu0 0.0
        %379 = vmatpush1.xpose.msra.mxu0 0.0
        %380 = vmatprep.subr.mxu0 0.0
        %381 = vmatpush1.xpose.msra.mxu0 0.0
        %382 = vmatprep.subr.mxu0 0.0
        %383 = vmatpush1.xpose.msra.mxu0 0.0
        %384 = vmatprep.subr.mxu0 0.0
        %385 = vmatpush1.xpose.msra.mxu0 0.0
        %386 = vmatprep.subr.mxu0 0.0
        %387 = vmatpush1.xpose.msra.mxu0 0.0
        %388 = vmatprep.subr.mxu0 0.0
        %389 = vmatpush1.xpose.msra.mxu0 0.0
        %390 = vmatprep.subr.mxu0 0.0
        %391 = vmatpush1.xpose.msra.mxu0 0.0
        %392 = vmatprep.subr.mxu0 0.0
        %393 = vmatpush1.xpose.msra.mxu0 0.0
        %394 = vmatprep.subr.mxu0 0.0
        %395 = vmatpush1.xpose.msra.mxu0 0.0
        %396 = vmatprep.mubr.f32.mxu0 0.0
        %397 = vmatmul.mubr.f32.gmra.mrb[0].mxu0 %v327
        %v398 = vpop.f32.mrb[0].mxu0
        %v399 = vadd.f32 0.0, %v398
        %v400 = vpop.f32.mrb[0].mxu0
        %401 = vdwg.mxu0
        %v402 = vld [vmem:[#allocation2] sm:$0xff]
        %v403 = vsel %vm325, %v399, -inf
        %404 = vmax.xlane.f32.xlu0 %v403
        %v405 = vpop.xlane.xlu0 %404
        %v406 = vmax.f32 %v402, %v405
        %v407 = vsub.f32 %v402, %v406
        %v408 = vmul.f32 %v407, 1.442695
        %v409 = vpow.pop %v408
        %411 = vset.pattern.permute.xlu0 0
        %412 = vperm.xlu0 %411, %v406
        %v413 = vpop.permute.xlu0 %412
        %v415 = vsub.f32 %v399, %v413
        %v416 = vmul.f32 %v415, 1.442695
        %v417 = vpow.pop %v416
        %v419 = vsel %vm325, %v417, 0
        %421 = vmatprep.subr.mxu0 0.0
        %422 = vmatpush1.msra.mxu0 %v324
        %423 = vmatprep.subr.mxu0 0.0
        %424 = vmatpush1.msra.mxu0 0.0
        %425 = vmatprep.subr.mxu0 0.0
        %426 = vmatpush1.msra.mxu0 0.0
        %427 = vmatprep.subr.mxu0 0.0
        %428 = vmatpush1.msra.mxu0 0.0
        %429 = vmatprep.subr.mxu0 0.0
        %430 = vmatpush1.msra.mxu0 0.0
        %431 = vmatprep.subr.mxu0 0.0
        %432 = vmatpush1.msra.mxu0 0.0
        %433 = vmatprep.subr.mxu0 0.0
        %434 = vmatpush1.msra.mxu0 0.0
        %435 = vmatprep.subr.mxu0 0.0
        %436 = vmatpush1.msra.mxu0 0.0
        %437 = vmatprep.subr.mxu0 0.0
        %438 = vmatpush1.msra.mxu0 0.0
        %439 = vmatprep.subr.mxu0 0.0
        %440 = vmatpush1.msra.mxu0 0.0
        %441 = vmatprep.subr.mxu0 0.0
        %442 = vmatpush1.msra.mxu0 0.0
        %443 = vmatprep.subr.mxu0 0.0
        %444 = vmatpush1.msra.mxu0 0.0
        %445 = vmatprep.subr.mxu0 0.0
        %446 = vmatpush1.msra.mxu0 0.0
        %447 = vmatprep.subr.mxu0 0.0
        %448 = vmatpush1.msra.mxu0 0.0
        %449 = vmatprep.subr.mxu0 0.0
        %450 = vmatpush1.msra.mxu0 0.0
        %451 = vmatprep.subr.mxu0 0.0
        %452 = vmatpush1.msra.mxu0 0.0
        %453 = vmatprep.subr.mxu0 0.0
        %454 = vmatpush1.msra.mxu0 0.0
        %455 = vmatprep.subr.mxu0 0.0
        %456 = vmatpush1.msra.mxu0 0.0
        %457 = vmatprep.subr.mxu0 0.0
        %458 = vmatpush1.msra.mxu0 0.0
        %459 = vmatprep.subr.mxu0 0.0
        %460 = vmatpush1.msra.mxu0 0.0
        %461 = vmatprep.subr.mxu0 0.0
        %462 = vmatpush1.msra.mxu0 0.0
        %463 = vmatprep.subr.mxu0 0.0
        %464 = vmatpush1.msra.mxu0 0.0
        %465 = vmatprep.subr.mxu0 0.0
        %466 = vmatpush1.msra.mxu0 0.0
        %467 = vmatprep.subr.mxu0 0.0
        %468 = vmatpush1.msra.mxu0 0.0
        %469 = vmatprep.subr.mxu0 0.0
        %470 = vmatpush1.msra.mxu0 0.0
        %471 = vmatprep.subr.mxu0 0.0
        %472 = vmatpush1.msra.mxu0 0.0
        %473 = vmatprep.subr.mxu0 0.0
        %474 = vmatpush1.msra.mxu0 0.0
        %475 = vmatprep.subr.mxu0 0.0
        %476 = vmatpush1.msra.mxu0 0.0
        %477 = vmatprep.subr.mxu0 0.0
        %478 = vmatpush1.msra.mxu0 0.0
        %479 = vmatprep.subr.mxu0 0.0
        %480 = vmatpush1.msra.mxu0 0.0
        %481 = vmatprep.subr.mxu0 0.0
        %482 = vmatpush1.msra.mxu0 0.0
        %483 = vmatprep.subr.mxu0 0.0
        %484 = vmatpush1.msra.mxu0 0.0
        %485 = vmatprep.mubr.f32.mxu0 0.0
        %486 = vmatmul.mubr.f32.gmra.mrb[0].mxu0 %v419
        %v487 = vpop.f32.mrb[0].mxu0
        %v488 = vadd.f32 0.0, %v487
        %v489 = vpop.f32.mrb[0].mxu0
        %490 = vdwg.mxu0
        %v491 = vld [vmem:[#allocation3] sm:$0xff]
        %493 = vset.pattern.permute.xlu0 0
        %494 = vperm.xlu0 %493, %v409
        %v495 = vpop.permute.xlu0 %494
        %v497 = vmul.f32 %v495, %v491
        %v498 = vadd.f32 %v497, %v488
        %vm499 = vcmask 72704
        %500 = vst.msk [vmem:[#allocation3] sm:$0xff] %vm499, %v498
        %vm501 = vcmask 7168
        %502 = vst.msk [vmem:[#allocation2] sm:$0xff] %vm501, %v406
        %v503 = vld [vmem:[%s293] sm:$0xff]
        %v504 = vld [vmem:[%s300] sm:$0xff]
        %v505 = vld [vmem:[%s307] sm:$0xff]
        %507 = vrot.lane.b32.xlu0 %v503, 120
        %v508 = vpop.permute.xlu0 %507
        %510 = vrot.lane.b32.xlu0 %v504, 120
        %v511 = vpop.permute.xlu0 %510
        %v512 = vsel %vm325, %v508, 0
        %v514 = vsel %vm325, %v511, 0
        %516 = vmatprep.subr.mxu0 0.0
        %517 = vmatpush1.xpose.msra.mxu0 %v514
        %518 = vmatprep.subr.mxu0 0.0
        %519 = vmatpush1.xpose.msra.mxu0 0.0
        %520 = vmatprep.subr.mxu0 0.0
        %521 = vmatpush1.xpose.msra.mxu0 0.0
        %522 = vmatprep.subr.mxu0 0.0
        %523 = vmatpush1.xpose.msra.mxu0 0.0
        %524 = vmatprep.subr.mxu0 0.0
        %525 = vmatpush1.xpose.msra.mxu0 0.0
        %526 = vmatprep.subr.mxu0 0.0
        %527 = vmatpush1.xpose.msra.mxu0 0.0
        %528 = vmatprep.subr.mxu0 0.0
        %529 = vmatpush1.xpose.msra.mxu0 0.0
        %530 = vmatprep.subr.mxu0 0.0
        %531 = vmatpush1.xpose.msra.mxu0 0.0
        %532 = vmatprep.subr.mxu0 0.0
        %533 = vmatpush1.xpose.msra.mxu0 0.0
        %534 = vmatprep.subr.mxu0 0.0
        %535 = vmatpush1.xpose.msra.mxu0 0.0
        %536 = vmatprep.subr.mxu0 0.0
        %537 = vmatpush1.xpose.msra.mxu0 0.0
        %538 = vmatprep.subr.mxu0 0.0
        %539 = vmatpush1.xpose.msra.mxu0 0.0
        %540 = vmatprep.subr.mxu0 0.0
        %541 = vmatpush1.xpose.msra.mxu0 0.0
        %542 = vmatprep.subr.mxu0 0.0
        %543 = vmatpush1.xpose.msra.mxu0 0.0
        %544 = vmatprep.subr.mxu0 0.0
        %545 = vmatpush1.xpose.msra.mxu0 0.0
        %546 = vmatprep.subr.mxu0 0.0
        %547 = vmatpush1.xpose.msra.mxu0 0.0
        %548 = vmatprep.subr.mxu0 0.0
        %549 = vmatpush1.xpose.msra.mxu0 0.0
        %550 = vmatprep.subr.mxu0 0.0
        %551 = vmatpush1.xpose.msra.mxu0 0.0
        %552 = vmatprep.subr.mxu0 0.0
        %553 = vmatpush1.xpose.msra.mxu0 0.0
        %554 = vmatprep.subr.mxu0 0.0
        %555 = vmatpush1.xpose.msra.mxu0 0.0
        %556 = vmatprep.subr.mxu0 0.0
        %557 = vmatpush1.xpose.msra.mxu0 0.0
        %558 = vmatprep.subr.mxu0 0.0
        %559 = vmatpush1.xpose.msra.mxu0 0.0
        %560 = vmatprep.subr.mxu0 0.0
        %561 = vmatpush1.xpose.msra.mxu0 0.0
        %562 = vmatprep.subr.mxu0 0.0
        %563 = vmatpush1.xpose.msra.mxu0 0.0
        %564 = vmatprep.subr.mxu0 0.0
        %565 = vmatpush1.xpose.msra.mxu0 0.0
        %566 = vmatprep.subr.mxu0 0.0
        %567 = vmatpush1.xpose.msra.mxu0 0.0
        %568 = vmatprep.subr.mxu0 0.0
        %569 = vmatpush1.xpose.msra.mxu0 0.0
        %570 = vmatprep.subr.mxu0 0.0
        %571 = vmatpush1.xpose.msra.mxu0 0.0
        %572 = vmatprep.subr.mxu0 0.0
        %573 = vmatpush1.xpose.msra.mxu0 0.0
        %574 = vmatprep.subr.mxu0 0.0
        %575 = vmatpush1.xpose.msra.mxu0 0.0
        %576 = vmatprep.subr.mxu0 0.0
        %577 = vmatpush1.xpose.msra.mxu0 0.0
        %578 = vmatprep.subr.mxu0 0.0
        %579 = vmatpush1.xpose.msra.mxu0 0.0
        %580 = vmatprep.mubr.f32.mxu0 0.0
        %581 = vmatmul.mubr.f32.gmra.mrb[0].mxu0 %v512
        %v582 = vpop.f32.mrb[0].mxu0
        %v583 = vadd.f32 0.0, %v582
        %v584 = vpop.f32.mrb[0].mxu0
        %585 = vdwg.mxu0
        %s586 = scalar_lea.vmem [#allocation2], 8
        %v587 = vld [vmem:[%s586] sm:$0xff]
        %v588 = vsel %vm325, %v583, -inf
        %589 = vmax.xlane.f32.xlu0 %v588
        %v590 = vpop.xlane.xlu0 %589
        %v591 = vmax.f32 %v587, %v590
        %v592 = vsub.f32 %v587, %v591
        %v593 = vmul.f32 %v592, 1.442695
        %v594 = vpow.pop %v593
        %596 = vset.pattern.permute.xlu0 0
        %597 = vperm.xlu0 %596, %v591
        %v598 = vpop.permute.xlu0 %597
        %v600 = vsub.f32 %v583, %v598
        %v601 = vmul.f32 %v600, 1.442695
        %v602 = vpow.pop %v601
        %604 = vrot.lane.b32.xlu0 %v505, 119
        %v605 = vpop.permute.xlu0 %604
        %v608 = vsel %vm325, %v602, 0
        %610 = vmatprep.subr.mxu0 0.0
        %611 = vmatpush1.msra.mxu0 %v605
        %612 = vmatprep.subr.mxu0 0.0
        %613 = vmatpush1.msra.mxu0 0.0
        %614 = vmatprep.subr.mxu0 0.0
        %615 = vmatpush1.msra.mxu0 0.0
        %616 = vmatprep.subr.mxu0 0.0
        %617 = vmatpush1.msra.mxu0 0.0
        %618 = vmatprep.subr.mxu0 0.0
        %619 = vmatpush1.msra.mxu0 0.0
        %620 = vmatprep.subr.mxu0 0.0
        %621 = vmatpush1.msra.mxu0 0.0
        %622 = vmatprep.subr.mxu0 0.0
        %623 = vmatpush1.msra.mxu0 0.0
        %624 = vmatprep.subr.mxu0 0.0
        %625 = vmatpush1.msra.mxu0 0.0
        %626 = vmatprep.subr.mxu0 0.0
        %627 = vmatpush1.msra.mxu0 0.0
        %628 = vmatprep.subr.mxu0 0.0
        %629 = vmatpush1.msra.mxu0 0.0
        %630 = vmatprep.subr.mxu0 0.0
        %631 = vmatpush1.msra.mxu0 0.0
        %632 = vmatprep.subr.mxu0 0.0
        %633 = vmatpush1.msra.mxu0 0.0
        %634 = vmatprep.subr.mxu0 0.0
        %635 = vmatpush1.msra.mxu0 0.0
        %636 = vmatprep.subr.mxu0 0.0
        %637 = vmatpush1.msra.mxu0 0.0
        %638 = vmatprep.subr.mxu0 0.0
        %639 = vmatpush1.msra.mxu0 0.0
        %640 = vmatprep.subr.mxu0 0.0
        %641 = vmatpush1.msra.mxu0 0.0
        %642 = vmatprep.subr.mxu0 0.0
        %643 = vmatpush1.msra.mxu0 0.0
        %644 = vmatprep.subr.mxu0 0.0
        %645 = vmatpush1.msra.mxu0 0.0
        %646 = vmatprep.subr.mxu0 0.0
        %647 = vmatpush1.msra.mxu0 0.0
        %648 = vmatprep.subr.mxu0 0.0
        %649 = vmatpush1.msra.mxu0 0.0
        %650 = vmatprep.subr.mxu0 0.0
        %651 = vmatpush1.msra.mxu0 0.0
        %652 = vmatprep.subr.mxu0 0.0
        %653 = vmatpush1.msra.mxu0 0.0
        %654 = vmatprep.subr.mxu0 0.0
        %655 = vmatpush1.msra.mxu0 0.0
        %656 = vmatprep.subr.mxu0 0.0
        %657 = vmatpush1.msra.mxu0 0.0
        %658 = vmatprep.subr.mxu0 0.0
        %659 = vmatpush1.msra.mxu0 0.0
        %660 = vmatprep.subr.mxu0 0.0
        %661 = vmatpush1.msra.mxu0 0.0
        %662 = vmatprep.subr.mxu0 0.0
        %663 = vmatpush1.msra.mxu0 0.0
        %664 = vmatprep.subr.mxu0 0.0
        %665 = vmatpush1.msra.mxu0 0.0
        %666 = vmatprep.subr.mxu0 0.0
        %667 = vmatpush1.msra.mxu0 0.0
        %668 = vmatprep.subr.mxu0 0.0
        %669 = vmatpush1.msra.mxu0 0.0
        %670 = vmatprep.subr.mxu0 0.0
        %671 = vmatpush1.msra.mxu0 0.0
        %672 = vmatprep.subr.mxu0 0.0
        %673 = vmatpush1.msra.mxu0 0.0
        %674 = vmatprep.mubr.f32.mxu0 0.0
        %675 = vmatmul.mubr.f32.gmra.mrb[0].mxu0 %v608
        %v676 = vpop.f32.mrb[0].mxu0
        %v677 = vadd.f32 0.0, %v676
        %v678 = vpop.f32.mrb[0].mxu0
        %679 = vdwg.mxu0
        %s680 = scalar_lea.vmem [#allocation3], 8
        %v681 = vld [vmem:[%s680] sm:$0xff]
        %683 = vset.pattern.permute.xlu0 0
        %684 = vperm.xlu0 %683, %v594
        %v685 = vpop.permute.xlu0 %684
        %v687 = vmul.f32 %v685, %v681
        %v688 = vadd.f32 %v687, %v677
        %689 = vst.msk [vmem:[%s680] sm:$0xff] %vm499, %v688
        %690 = vst.msk [vmem:[%s586] sm:$0xff] %vm501, %v591
        %v691 = vld [vmem:[%s293] sm:$0xff]
        %v692 = vld [vmem:[%s300] sm:$0xff]
        %v693 = vld [vmem:[%s307] sm:$0xff]
        %695 = vrot.lane.b32.xlu0 %v691, 112
        %v696 = vpop.permute.xlu0 %695
        %698 = vrot.lane.b32.xlu0 %v692, 112
        %v699 = vpop.permute.xlu0 %698
        %v700 = vsel %vm325, %v696, 0
        %v702 = vsel %vm325, %v699, 0
        %704 = vmatprep.subr.mxu0 0.0
        %705 = vmatpush1.xpose.msra.mxu0 %v702
        %706 = vmatprep.subr.mxu0 0.0
        %707 = vmatpush1.xpose.msra.mxu0 0.0
        %708 = vmatprep.subr.mxu0 0.0
        %709 = vmatpush1.xpose.msra.mxu0 0.0
        %710 = vmatprep.subr.mxu0 0.0
        %711 = vmatpush1.xpose.msra.mxu0 0.0
        %712 = vmatprep.subr.mxu0 0.0
        %713 = vmatpush1.xpose.msra.mxu0 0.0
        %714 = vmatprep.subr.mxu0 0.0
        %715 = vmatpush1.xpose.msra.mxu0 0.0
        %716 = vmatprep.subr.mxu0 0.0
        %717 = vmatpush1.xpose.msra.mxu0 0.0
        %718 = vmatprep.subr.mxu0 0.0
        %719 = vmatpush1.xpose.msra.mxu0 0.0
        %720 = vmatprep.subr.mxu0 0.0
        %721 = vmatpush1.xpose.msra.mxu0 0.0
        %722 = vmatprep.subr.mxu0 0.0
        %723 = vmatpush1.xpose.msra.mxu0 0.0
        %724 = vmatprep.subr.mxu0 0.0
        %725 = vmatpush1.xpose.msra.mxu0 0.0
        %726 = vmatprep.subr.mxu0 0.0
        %727 = vmatpush1.xpose.msra.mxu0 0.0
        %728 = vmatprep.subr.mxu0 0.0
        %729 = vmatpush1.xpose.msra.mxu0 0.0
        %730 = vmatprep.subr.mxu0 0.0
        %731 = vmatpush1.xpose.msra.mxu0 0.0
        %732 = vmatprep.subr.mxu0 0.0
        %733 = vmatpush1.xpose.msra.mxu0 0.0
        %734 = vmatprep.subr.mxu0 0.0
        %735 = vmatpush1.xpose.msra.mxu0 0.0
        %736 = vmatprep.subr.mxu0 0.0
        %737 = vmatpush1.xpose.msra.mxu0 0.0
        %738 = vmatprep.subr.mxu0 0.0
        %739 = vmatpush1.xpose.msra.mxu0 0.0
        %740 = vmatprep.subr.mxu0 0.0
        %741 = vmatpush1.xpose.msra.mxu0 0.0
        %742 = vmatprep.subr.mxu0 0.0
        %743 = vmatpush1.xpose.msra.mxu0 0.0
        %744 = vmatprep.subr.mxu0 0.0
        %745 = vmatpush1.xpose.msra.mxu0 0.0
        %746 = vmatprep.subr.mxu0 0.0
        %747 = vmatpush1.xpose.msra.mxu0 0.0
        %748 = vmatprep.subr.mxu0 0.0
        %749 = vmatpush1.xpose.msra.mxu0 0.0
        %750 = vmatprep.subr.mxu0 0.0
        %751 = vmatpush1.xpose.msra.mxu0 0.0
        %752 = vmatprep.subr.mxu0 0.0
        %753 = vmatpush1.xpose.msra.mxu0 0.0
        %754 = vmatprep.subr.mxu0 0.0
        %755 = vmatpush1.xpose.msra.mxu0 0.0
        %756 = vmatprep.subr.mxu0 0.0
        %757 = vmatpush1.xpose.msra.mxu0 0.0
        %758 = vmatprep.subr.mxu0 0.0
        %759 = vmatpush1.xpose.msra.mxu0 0.0
        %760 = vmatprep.subr.mxu0 0.0
        %761 = vmatpush1.xpose.msra.mxu0 0.0
        %762 = vmatprep.subr.mxu0 0.0
        %763 = vmatpush1.xpose.msra.mxu0 0.0
        %764 = vmatprep.subr.mxu0 0.0
        %765 = vmatpush1.xpose.msra.mxu0 0.0
        %766 = vmatprep.subr.mxu0 0.0
        %767 = vmatpush1.xpose.msra.mxu0 0.0
        %768 = vmatprep.mubr.f32.mxu0 0.0
        %769 = vmatmul.mubr.f32.gmra.mrb[0].mxu0 %v700
        %v770 = vpop.f32.mrb[0].mxu0
        %v771 = vadd.f32 0.0, %v770
        %v772 = vpop.f32.mrb[0].mxu0
        %773 = vdwg.mxu0
        %s774 = scalar_lea.vmem [#allocation2], 16
        %v775 = vld [vmem:[%s774] sm:$0xff]
        %v776 = vsel %vm325, %v771, -inf
        %777 = vmax.xlane.f32.xlu0 %v776
        %v778 = vpop.xlane.xlu0 %777
        %v779 = vmax.f32 %v775, %v778
        %v780 = vsub.f32 %v775, %v779
        %v781 = vmul.f32 %v780, 1.442695
        %v782 = vpow.pop %v781
        %784 = vset.pattern.permute.xlu0 0
        %785 = vperm.xlu0 %784, %v779
        %v786 = vpop.permute.xlu0 %785
        %v788 = vsub.f32 %v771, %v786
        %v789 = vmul.f32 %v788, 1.442695
        %v790 = vpow.pop %v789
        %792 = vrot.lane.b32.xlu0 %v693, 110
        %v793 = vpop.permute.xlu0 %792
        %v796 = vsel %vm325, %v790, 0
        %798 = vmatprep.subr.mxu0 0.0
        %799 = vmatpush1.msra.mxu0 %v793
        %800 = vmatprep.subr.mxu0 0.0
        %801 = vmatpush1.msra.mxu0 0.0
        %802 = vmatprep.subr.mxu0 0.0
        %803 = vmatpush1.msra.mxu0 0.0
        %804 = vmatprep.subr.mxu0 0.0
        %805 = vmatpush1.msra.mxu0 0.0
        %806 = vmatprep.subr.mxu0 0.0
        %807 = vmatpush1.msra.mxu0 0.0
        %808 = vmatprep.subr.mxu0 0.0
        %809 = vmatpush1.msra.mxu0 0.0
        %810 = vmatprep.subr.mxu0 0.0
        %811 = vmatpush1.msra.mxu0 0.0
        %812 = vmatprep.subr.mxu0 0.0
        %813 = vmatpush1.msra.mxu0 0.0
        %814 = vmatprep.subr.mxu0 0.0
        %815 = vmatpush1.msra.mxu0 0.0
        %816 = vmatprep.subr.mxu0 0.0
        %817 = vmatpush1.msra.mxu0 0.0
        %818 = vmatprep.subr.mxu0 0.0
        %819 = vmatpush1.msra.mxu0 0.0
        %820 = vmatprep.subr.mxu0 0.0
        %821 = vmatpush1.msra.mxu0 0.0
        %822 = vmatprep.subr.mxu0 0.0
        %823 = vmatpush1.msra.mxu0 0.0
        %824 = vmatprep.subr.mxu0 0.0
        %825 = vmatpush1.msra.mxu0 0.0
        %826 = vmatprep.subr.mxu0 0.0
        %827 = vmatpush1.msra.mxu0 0.0
        %828 = vmatprep.subr.mxu0 0.0
        %829 = vmatpush1.msra.mxu0 0.0
        %830 = vmatprep.subr.mxu0 0.0
        %831 = vmatpush1.msra.mxu0 0.0
        %832 = vmatprep.subr.mxu0 0.0
        %833 = vmatpush1.msra.mxu0 0.0
        %834 = vmatprep.subr.mxu0 0.0
        %835 = vmatpush1.msra.mxu0 0.0
        %836 = vmatprep.subr.mxu0 0.0
        %837 = vmatpush1.msra.mxu0 0.0
        %838 = vmatprep.subr.mxu0 0.0
        %839 = vmatpush1.msra.mxu0 0.0
        %840 = vmatprep.subr.mxu0 0.0
        %841 = vmatpush1.msra.mxu0 0.0
        %842 = vmatprep.subr.mxu0 0.0
        %843 = vmatpush1.msra.mxu0 0.0
        %844 = vmatprep.subr.mxu0 0.0
        %845 = vmatpush1.msra.mxu0 0.0
        %846 = vmatprep.subr.mxu0 0.0
        %847 = vmatpush1.msra.mxu0 0.0
        %848 = vmatprep.subr.mxu0 0.0
        %849 = vmatpush1.msra.mxu0 0.0
        %850 = vmatprep.subr.mxu0 0.0
        %851 = vmatpush1.msra.mxu0 0.0
        %852 = vmatprep.subr.mxu0 0.0
        %853 = vmatpush1.msra.mxu0 0.0
        %854 = vmatprep.subr.mxu0 0.0
        %855 = vmatpush1.msra.mxu0 0.0
        %856 = vmatprep.subr.mxu0 0.0
        %857 = vmatpush1.msra.mxu0 0.0
        %858 = vmatprep.subr.mxu0 0.0
        %859 = vmatpush1.msra.mxu0 0.0
        %860 = vmatprep.subr.mxu0 0.0
        %861 = vmatpush1.msra.mxu0 0.0
        %862 = vmatprep.mubr.f32.mxu0 0.0
        %863 = vmatmul.mubr.f32.gmra.mrb[0].mxu0 %v796
        %v864 = vpop.f32.mrb[0].mxu0
        %v865 = vadd.f32 0.0, %v864
        %v866 = vpop.f32.mrb[0].mxu0
        %867 = vdwg.mxu0
        %s868 = scalar_lea.vmem [#allocation3], 16
        %v869 = vld [vmem:[%s868] sm:$0xff]
        %871 = vset.pattern.permute.xlu0 0
        %872 = vperm.xlu0 %871, %v782
        %v873 = vpop.permute.xlu0 %872
        %v875 = vmul.f32 %v873, %v869
        %v876 = vadd.f32 %v875, %v865
        %877 = vst.msk [vmem:[%s868] sm:$0xff] %vm499, %v876
        %878 = vst.msk [vmem:[%s774] sm:$0xff] %vm501, %v779
        %v879 = vld [vmem:[%s293] sm:$0xff]
        %v880 = vld [vmem:[%s300] sm:$0xff]
        %v881 = vld [vmem:[%s307] sm:$0xff]
        %883 = vrot.lane.b32.xlu0 %v879, 104
        %v884 = vpop.permute.xlu0 %883
        %886 = vrot.lane.b32.xlu0 %v880, 104
        %v887 = vpop.permute.xlu0 %886
        %v888 = vsel %vm325, %v884, 0
        %v890 = vsel %vm325, %v887, 0
        %892 = vmatprep.subr.mxu0 0.0
        %893 = vmatpush1.xpose.msra.mxu0 %v890
        %894 = vmatprep.subr.mxu0 0.0
        %895 = vmatpush1.xpose.msra.mxu0 0.0
        %896 = vmatprep.subr.mxu0 0.0
        %897 = vmatpush1.xpose.msra.mxu0 0.0
        %898 = vmatprep.subr.mxu0 0.0
        %899 = vmatpush1.xpose.msra.mxu0 0.0
        %900 = vmatprep.subr.mxu0 0.0
        %901 = vmatpush1.xpose.msra.mxu0 0.0
        %902 = vmatprep.subr.mxu0 0.0
        %903 = vmatpush1.xpose.msra.mxu0 0.0
        %904 = vmatprep.subr.mxu0 0.0
        %905 = vmatpush1.xpose.msra.mxu0 0.0
        %906 = vmatprep.subr.mxu0 0.0
        %907 = vmatpush1.xpose.msra.mxu0 0.0
        %908 = vmatprep.subr.mxu0 0.0
        %909 = vmatpush1.xpose.msra.mxu0 0.0
        %910 = vmatprep.subr.mxu0 0.0
        %911 = vmatpush1.xpose.msra.mxu0 0.0
        %912 = vmatprep.subr.mxu0 0.0
        %913 = vmatpush1.xpose.msra.mxu0 0.0
        %914 = vmatprep.subr.mxu0 0.0
        %915 = vmatpush1.xpose.msra.mxu0 0.0
        %916 = vmatprep.subr.mxu0 0.0
        %917 = vmatpush1.xpose.msra.mxu0 0.0
        %918 = vmatprep.subr.mxu0 0.0
        %919 = vmatpush1.xpose.msra.mxu0 0.0
        %920 = vmatprep.subr.mxu0 0.0
        %921 = vmatpush1.xpose.msra.mxu0 0.0
        %922 = vmatprep.subr.mxu0 0.0
        %923 = vmatpush1.xpose.msra.mxu0 0.0
        %924 = vmatprep.subr.mxu0 0.0
        %925 = vmatpush1.xpose.msra.mxu0 0.0
        %926 = vmatprep.subr.mxu0 0.0
        %927 = vmatpush1.xpose.msra.mxu0 0.0
        %928 = vmatprep.subr.mxu0 0.0
        %929 = vmatpush1.xpose.msra.mxu0 0.0
        %930 = vmatprep.subr.mxu0 0.0
        %931 = vmatpush1.xpose.msra.mxu0 0.0
        %932 = vmatprep.subr.mxu0 0.0
        %933 = vmatpush1.xpose.msra.mxu0 0.0
        %934 = vmatprep.subr.mxu0 0.0
        %935 = vmatpush1.xpose.msra.mxu0 0.0
        %936 = vmatprep.subr.mxu0 0.0
        %937 = vmatpush1.xpose.msra.mxu0 0.0
        %938 = vmatprep.subr.mxu0 0.0
        %939 = vmatpush1.xpose.msra.mxu0 0.0
        %940 = vmatprep.subr.mxu0 0.0
        %941 = vmatpush1.xpose.msra.mxu0 0.0
        %942 = vmatprep.subr.mxu0 0.0
        %943 = vmatpush1.xpose.msra.mxu0 0.0
        %944 = vmatprep.subr.mxu0 0.0
        %945 = vmatpush1.xpose.msra.mxu0 0.0
        %946 = vmatprep.subr.mxu0 0.0
        %947 = vmatpush1.xpose.msra.mxu0 0.0
        %948 = vmatprep.subr.mxu0 0.0
        %949 = vmatpush1.xpose.msra.mxu0 0.0
        %950 = vmatprep.subr.mxu0 0.0
        %951 = vmatpush1.xpose.msra.mxu0 0.0
        %952 = vmatprep.subr.mxu0 0.0
        %953 = vmatpush1.xpose.msra.mxu0 0.0
        %954 = vmatprep.subr.mxu0 0.0
        %955 = vmatpush1.xpose.msra.mxu0 0.0
        %956 = vmatprep.mubr.f32.mxu0 0.0
        %957 = vmatmul.mubr.f32.gmra.mrb[0].mxu0 %v888
        %v958 = vpop.f32.mrb[0].mxu0
        %v959 = vadd.f32 0.0, %v958
        %v960 = vpop.f32.mrb[0].mxu0
        %961 = vdwg.mxu0
        %s962 = scalar_lea.vmem [#allocation2], 24
        %v963 = vld [vmem:[%s962] sm:$0xff]
        %v964 = vsel %vm325, %v959, -inf
        %965 = vmax.xlane.f32.xlu0 %v964
        %v966 = vpop.xlane.xlu0 %965
        %v967 = vmax.f32 %v963, %v966
        %v968 = vsub.f32 %v963, %v967
        %v969 = vmul.f32 %v968, 1.442695
        %v970 = vpow.pop %v969
        %972 = vset.pattern.permute.xlu0 0
        %973 = vperm.xlu0 %972, %v967
        %v974 = vpop.permute.xlu0 %973
        %v976 = vsub.f32 %v959, %v974
        %v977 = vmul.f32 %v976, 1.442695
        %v978 = vpow.pop %v977
        %980 = vrot.lane.b32.xlu0 %v881, 101
        %v981 = vpop.permute.xlu0 %980
        %v984 = vsel %vm325, %v978, 0
        %986 = vmatprep.subr.mxu0 0.0
        %987 = vmatpush1.msra.mxu0 %v981
        %988 = vmatprep.subr.mxu0 0.0
        %989 = vmatpush1.msra.mxu0 0.0
        %990 = vmatprep.subr.mxu0 0.0
        %991 = vmatpush1.msra.mxu0 0.0
        %992 = vmatprep.subr.mxu0 0.0
        %993 = vmatpush1.msra.mxu0 0.0
        %994 = vmatprep.subr.mxu0 0.0
        %995 = vmatpush1.msra.mxu0 0.0
        %996 = vmatprep.subr.mxu0 0.0
        %997 = vmatpush1.msra.mxu0 0.0
        %998 = vmatprep.subr.mxu0 0.0
        %999 = vmatpush1.msra.mxu0 0.0
        %1000 = vmatprep.subr.mxu0 0.0
        %1001 = vmatpush1.msra.mxu0 0.0
        %1002 = vmatprep.subr.mxu0 0.0
        %1003 = vmatpush1.msra.mxu0 0.0
        %1004 = vmatprep.subr.mxu0 0.0
        %1005 = vmatpush1.msra.mxu0 0.0
        %1006 = vmatprep.subr.mxu0 0.0
        %1007 = vmatpush1.msra.mxu0 0.0
        %1008 = vmatprep.subr.mxu0 0.0
        %1009 = vmatpush1.msra.mxu0 0.0
        %1010 = vmatprep.subr.mxu0 0.0
        %1011 = vmatpush1.msra.mxu0 0.0
        %1012 = vmatprep.subr.mxu0 0.0
        %1013 = vmatpush1.msra.mxu0 0.0
        %1014 = vmatprep.subr.mxu0 0.0
        %1015 = vmatpush1.msra.mxu0 0.0
        %1016 = vmatprep.subr.mxu0 0.0
        %1017 = vmatpush1.msra.mxu0 0.0
        %1018 = vmatprep.subr.mxu0 0.0
        %1019 = vmatpush1.msra.mxu0 0.0
        %1020 = vmatprep.subr.mxu0 0.0
        %1021 = vmatpush1.msra.mxu0 0.0
        %1022 = vmatprep.subr.mxu0 0.0
        %1023 = vmatpush1.msra.mxu0 0.0
        %1024 = vmatprep.subr.mxu0 0.0
        %1025 = vmatpush1.msra.mxu0 0.0
        %1026 = vmatprep.subr.mxu0 0.0
        %1027 = vmatpush1.msra.mxu0 0.0
        %1028 = vmatprep.subr.mxu0 0.0
        %1029 = vmatpush1.msra.mxu0 0.0
        %1030 = vmatprep.subr.mxu0 0.0
        %1031 = vmatpush1.msra.mxu0 0.0
        %1032 = vmatprep.subr.mxu0 0.0
        %1033 = vmatpush1.msra.mxu0 0.0
        %1034 = vmatprep.subr.mxu0 0.0
        %1035 = vmatpush1.msra.mxu0 0.0
        %1036 = vmatprep.subr.mxu0 0.0
        %1037 = vmatpush1.msra.mxu0 0.0
        %1038 = vmatprep.subr.mxu0 0.0
        %1039 = vmatpush1.msra.mxu0 0.0
        %1040 = vmatprep.subr.mxu0 0.0
        %1041 = vmatpush1.msra.mxu0 0.0
        %1042 = vmatprep.subr.mxu0 0.0
        %1043 = vmatpush1.msra.mxu0 0.0
        %1044 = vmatprep.subr.mxu0 0.0
        %1045 = vmatpush1.msra.mxu0 0.0
        %1046 = vmatprep.subr.mxu0 0.0
        %1047 = vmatpush1.msra.mxu0 0.0
        %1048 = vmatprep.subr.mxu0 0.0
        %1049 = vmatpush1.msra.mxu0 0.0
        %1050 = vmatprep.mubr.f32.mxu0 0.0
        %1051 = vmatmul.mubr.f32.gmra.mrb[0].mxu0 %v984
        %v1052 = vpop.f32.mrb[0].mxu0
        %v1053 = vadd.f32 0.0, %v1052
        %v1054 = vpop.f32.mrb[0].mxu0
        %1055 = vdwg.mxu0
        %s1056 = scalar_lea.vmem [#allocation3], 24
        %v1057 = vld [vmem:[%s1056] sm:$0xff]
        %1059 = vset.pattern.permute.xlu0 0
        %1060 = vperm.xlu0 %1059, %v970
        %v1061 = vpop.permute.xlu0 %1060
        %v1063 = vmul.f32 %v1061, %v1057
        %v1064 = vadd.f32 %v1063, %v1053
        %1065 = vst.msk [vmem:[%s1056] sm:$0xff] %vm499, %v1064
        %1066 = vst.msk [vmem:[%s962] sm:$0xff] %vm501, %v967
        // Predicated region
        $region45: #{attention_forward.3} parent=39 // pred_check
          %p1067 = pneg %p308
        $region46: #{attention_forward.3} parent=39 // pred_check_branch
          %1069 = sbr.rel (%p1067) target = $region48
        $region47: #{attention_forward.3} parent=39 // pred_region
          %v1070 = vld [vmem:[#allocation3] sm:$0xff]
          %v1071 = vrcp.pop %v1070
          %1073 = vset.pattern.permute.xlu0 8
          %1074 = vperm.xlu0 %1073, %v1071
          %v1075 = vpop.permute.xlu0 %1074
          %v1077 = vmul.f32 %v1070, %v1075
          %v1078 = vld [vmem:[%s680] sm:$0xff]
          %v1079 = vrcp.pop %v1078
          %1081 = vset.pattern.permute.xlu0 8
          %1082 = vperm.xlu0 %1081, %v1079
          %v1083 = vpop.permute.xlu0 %1082
          %v1085 = vmul.f32 %v1078, %v1083
          %v1086 = vld [vmem:[%s868] sm:$0xff]
          %v1087 = vrcp.pop %v1086
          %1089 = vset.pattern.permute.xlu0 8
          %1090 = vperm.xlu0 %1089, %v1087
          %v1091 = vpop.permute.xlu0 %1090
          %v1093 = vmul.f32 %v1086, %v1091
          %v1094 = vld [vmem:[%s1056] sm:$0xff]
          %v1095 = vrcp.pop %v1094
          %1097 = vset.pattern.permute.xlu0 8
          %1098 = vperm.xlu0 %1097, %v1095
          %v1099 = vpop.permute.xlu0 %1098
          %v1101 = vmul.f32 %v1094, %v1099
          %1103 = vrot.lane.b32.xlu0 %v1085, 8
          %v1104 = vpop.permute.xlu0 %1103
          %1107 = vrot.lane.b32.xlu0 %v1093, 16
          %v1108 = vpop.permute.xlu0 %1107
          %1111 = vrot.lane.b32.xlu0 %v1101, 24
          %v1112 = vpop.permute.xlu0 %1111
          %v1114 = vsel %vm325, %v1077, %v1104
          %vm1115 = vcmask 130048
          %v1116 = vsel %vm1115, %v1114, %v1108
          %vm1117 = vcmask 195584
          %v1118 = vsel %vm1117, %v1116, %v1112
          %v1119 = vld [vmem:[%s3] sm:$0xff]
          %v1120 = vld [vmem:[%s3 + $0x8] sm:$0xff]
          %v1121 = vld [vmem:[%s3 + $0x10] sm:$0xff]
          %v1122 = vld [vmem:[%s3 + $0x18] sm:$0xff]
          %v1123 = vld [vmem:[%s4] sm:$0x1]
          %v1125 = vlaneseq
          %v1126 = vshrl.u32 %v1125, 7
          %v1127 = vsub.s32 0, %v1126
          %v1128 = vrot.slane %v1123, %v1127
          %vm1130 = vcmask 261120
          %v1132 = vsel %vm1130, %v1118, 0
          %v1135 = vsel %vm1130, %v1119, 0
          %v1138 = vsel %vm1130, %v1120, 0
          %v1141 = vsel %vm1130, %v1121, 0
          %v1144 = vsel %vm1130, %v1122, 0
          %1146 = vmatprep.subr.mxu0 0.0
          %1147 = vmatpush1.xpose.msra.mxu0 %v1135
          %1148 = vmatprep.subr.mxu0 0.0
          %1149 = vmatpush1.xpose.msra.mxu0 %v1138
          %1150 = vmatprep.subr.mxu0 0.0
          %1151 = vmatpush1.xpose.msra.mxu0 %v1141
          %1152 = vmatprep.subr.mxu0 0.0
          %1153 = vmatpush1.xpose.msra.mxu0 %v1144
          %1154 = vmatprep.subr.mxu0 0.0
          %1155 = vmatpush1.xpose.msra.mxu0 0.0
          %1156 = vmatprep.subr.mxu0 0.0
          %1157 = vmatpush1.xpose.msra.mxu0 0.0
          %1158 = vmatprep.subr.mxu0 0.0
          %1159 = vmatpush1.xpose.msra.mxu0 0.0
          %1160 = vmatprep.subr.mxu0 0.0
          %1161 = vmatpush1.xpose.msra.mxu0 0.0
          %1162 = vmatprep.subr.mxu0 0.0
          %1163 = vmatpush1.xpose.msra.mxu0 0.0
          %1164 = vmatprep.subr.mxu0 0.0
          %1165 = vmatpush1.xpose.msra.mxu0 0.0
          %1166 = vmatprep.subr.mxu0 0.0
          %1167 = vmatpush1.xpose.msra.mxu0 0.0
          %1168 = vmatprep.subr.mxu0 0.0
          %1169 = vmatpush1.xpose.msra.mxu0 0.0
          %1170 = vmatprep.subr.mxu0 0.0
          %1171 = vmatpush1.xpose.msra.mxu0 0.0
          %1172 = vmatprep.subr.mxu0 0.0
          %1173 = vmatpush1.xpose.msra.mxu0 0.0
          %1174 = vmatprep.subr.mxu0 0.0
          %1175 = vmatpush1.xpose.msra.mxu0 0.0
          %1176 = vmatprep.subr.mxu0 0.0
          %1177 = vmatpush1.xpose.msra.mxu0 0.0
          %1178 = vmatprep.subr.mxu0 0.0
          %1179 = vmatpush1.xpose.msra.mxu0 0.0
          %1180 = vmatprep.subr.mxu0 0.0
          %1181 = vmatpush1.xpose.msra.mxu0 0.0
          %1182 = vmatprep.subr.mxu0 0.0
          %1183 = vmatpush1.xpose.msra.mxu0 0.0
          %1184 = vmatprep.subr.mxu0 0.0
          %1185 = vmatpush1.xpose.msra.mxu0 0.0
          %1186 = vmatprep.subr.mxu0 0.0
          %1187 = vmatpush1.xpose.msra.mxu0 0.0
          %1188 = vmatprep.subr.mxu0 0.0
          %1189 = vmatpush1.xpose.msra.mxu0 0.0
          %1190 = vmatprep.subr.mxu0 0.0
          %1191 = vmatpush1.xpose.msra.mxu0 0.0
          %1192 = vmatprep.subr.mxu0 0.0
          %1193 = vmatpush1.xpose.msra.mxu0 0.0
          %1194 = vmatprep.subr.mxu0 0.0
          %1195 = vmatpush1.xpose.msra.mxu0 0.0
          %1196 = vmatprep.subr.mxu0 0.0
          %1197 = vmatpush1.xpose.msra.mxu0 0.0
          %1198 = vmatprep.subr.mxu0 0.0
          %1199 = vmatpush1.xpose.msra.mxu0 0.0
          %1200 = vmatprep.subr.mxu0 0.0
          %1201 = vmatpush1.xpose.msra.mxu0 0.0
          %1202 = vmatprep.subr.mxu0 0.0
          %1203 = vmatpush1.xpose.msra.mxu0 0.0
          %1204 = vmatprep.subr.mxu0 0.0
          %1205 = vmatpush1.xpose.msra.mxu0 0.0
          %1206 = vmatprep.subr.mxu0 0.0
          %1207 = vmatpush1.xpose.msra.mxu0 0.0
          %1208 = vmatprep.subr.mxu0 0.0
          %1209 = vmatpush1.xpose.msra.mxu0 0.0
          %1210 = vmatprep.mubr.f32.mxu0 0.0
          %1211 = vmatmul.mubr.f32.gmra.mrb[0].mxu0 %v1132
          %v1212 = vpop.f32.mrb[0].mxu0
          %v1213 = vadd.f32 %v1128, %v1212
          %v1214 = vpop.f32.mrb[0].mxu0
          %1215 = vdwg.mxu0
          %1216 = vst.msk [vmem:[%s286] sm:$0xff] %vm1130, %v1213
        $region48: #{attention_forward.3} parent=39 // pred_fallthru
          _
        %s1217 = sand.u32 %s174, 1
        %s1218 = scalar_lea.sflag [#allocation5], %s1217
        %s1219 = sand.u32 %s174, 1
        %s1220 = smul.addr %s1219, 8
        %s1221 = scalar_lea.vmem [#allocation4], %s1220
        // Predicated region
        $region49: #{attention_forward.3} parent=39 // pred_check
          %p1222 = pneg %p184
        $region50: #{attention_forward.3} parent=39 // pred_check_branch
          %1224 = sbr.rel (%p1222) target = $region52
        $region51: #{attention_forward.3} parent=39 // pred_region
          %s1226 = ssub.s32 128, 128
          %1227 = vsyncadd %s1218, %s1226
          %s1228 = sadd.s32 %s25, %s24
          %s1229 = smul.addr %s1228, 128
          %s1230 = scalar_lea.hbm %s5, %s1229
          %s1232 = sshll.u32 %s1221, 4
          %s1233 = int_to_ptr.vmem [resolvable:$true] %s1232
          %1235 = dma.vmem_to_hbm [thread:$0]  %s1233, 128, %s1230, %s1218
        $region52: #{attention_forward.3} parent=39 // pred_fallthru
          _
      $region40: #{attention_forward.3} parent=5 // pred_fallthru
        _
      %p1236 = scmp.le.s32.totalorder 2, %s14
      // Predicated region
      $region53: #{attention_forward.3} parent=5 // pred_check
        %p1237 = pneg %p1236
      $region54: #{attention_forward.3} parent=5 // pred_check_branch
        %1239 = sbr.rel (%p1237) target = $region56
      $region55: #{attention_forward.3} parent=5 // pred_region
        %s1240 = ssub.s32 %s14, 2
        // Predicated region
        $region57: #{attention_forward.3} parent=55 // pred_check
          %p1241 = pneg %p190
        $region58: #{attention_forward.3} parent=55 // pred_check_branch
          %1243 = sbr.rel (%p1241) target = $region60
        $region59: #{attention_forward.3} parent=55 // pred_region
          %s1244 = sand.u32 %s175, 1
          %s1245 = scalar_lea.sflag [#allocation5], %s1244
          %s1246 = sand.u32 %s175, 1
          %s1247 = smul.addr %s1246, 8
          %s1248 = scalar_lea.vmem [#allocation4], %s1247
          %1249 = dma.done %s1245, 128
        $region60: #{attention_forward.3} parent=55 // pred_fallthru
          _
      $region56: #{attention_forward.3} parent=5 // pred_fallthru
        _
    $region6: #{attention_forward.3} parent=1 // loop_footer
      %s18 = sadd.s32 1, %s14
    $region7: #{attention_forward.3} parent=1 // loop_footer_branch
      %13 = sbr.rel target = $region3
    $region8: #{attention_forward.3} parent=1 // loop_exit
      _
    %1250 = vsyncpa [#allocation5], 1
    %s1251 = scalar_lea.sflag [#allocation5], 1
    %1252 = vsyncpa %s1251, 1

</llo_original>
